<compile_context>
chip_gen: v7x
topology: tpu7x:2x2x1
jax: 0.10.0
libtpu: 0.0.40
codegen_flags: <defaults>
</compile_context>

<pallas_src>
import functools
import math

import jax
import jax.numpy as jnp
from jax import lax
from jax.experimental import pallas as pl
from jax.experimental.pallas import tpu as pltpu


def _rpa_kernel(resp_ref, prm_ref, wq_ref, bq_ref, wkv_ref, bkv_ref, out_ref):
    """One batch tile per grid step.

    resp_ref: (Bt, Sr, H)   prm_ref: (Bt, Sp, H)
    wq_ref:   (H, H)        bq_ref:  (1, H)          (pre-transposed)
    wkv_ref:  (H, 2H)       bkv_ref: (1, 2H)         (K|V fused, pre-transposed)
    out_ref:  (Bt, Sr, H)
    """
    Bt, Sr, H = resp_ref.shape
    _, Sp, _ = prm_ref.shape

    # Fold batch into the matmul M dimension: fat MXU passes instead of Sr-row ones.
    resp2d = resp_ref[...].reshape(Bt * Sr, H)
    prm2d = prm_ref[...].reshape(Bt * Sp, H)

    # Projections (MXU, f32 accumulation). K and V come out of one fused matmul.
    q = jnp.dot(resp2d, wq_ref[...], preferred_element_type=jnp.float32) + bq_ref[...]
    kv = jnp.dot(prm2d, wkv_ref[...], preferred_element_type=jnp.float32) + bkv_ref[...]

    q = q.reshape(Bt, Sr, H)
    kv = kv.reshape(Bt, Sp, 2 * H)
    k = kv[:, :, :H]
    v = kv[:, :, H:]

    # Scores (Bt, Sr, Sp): contract the hidden dim directly -- no explicit transpose.
    scores = lax.dot_general(
        q, k,
        dimension_numbers=(((2,), (2,)), ((0,), (0,))),
        preferred_element_type=jnp.float32,
    )
    scores = scores * jnp.float32(1.0 / math.sqrt(H))  # compile-time constant scale

    # Numerically stable softmax over the prompt axis; reciprocal goes to the EUP.
    m = jnp.max(scores, axis=-1, keepdims=True)
    e = jnp.exp(scores - m)
    inv_l = pl.reciprocal(jnp.sum(e, axis=-1, keepdims=True), approx=True)
    w = e * inv_l

    # Context (Bt, Sr, H).
    ctx = lax.dot_general(
        w, v,
        dimension_numbers=(((2,), (1,)), ((0,), (0,))),
        preferred_element_type=jnp.float32,
    )
    out_ref[...] = ctx.astype(out_ref.dtype)


def _weight_spec(shape, buffer_count):
    """BlockSpec for grid-invariant operands (weights/biases)."""
    index_map = lambda b: (0,) * len(shape)
    if buffer_count is None:
        return pl.BlockSpec(shape, index_map)
    return pl.BlockSpec(shape, index_map, pipeline_mode=pl.Buffered(buffer_count))


def _default_batch_tile(B, Sr):
    """Aim for >=128 M-rows per projection matmul, but keep >=2 grid steps
    (v7x has two TensorCores) whenever the batch allows it."""
    bt = max(1, 128 // max(Sr, 1))
    bt = min(bt, B)
    if B >= 2:
        bt = min(bt, max(1, B // 2))
    while B % bt:
        bt -= 1
    return max(bt, 1)


@functools.partial(jax.jit, static_argnames=("batch_tile", "weight_buffer_count"))
def _rpa_call(response, prompt, wq_t, bq, wkv_t, bkv, *, batch_tile,
              weight_buffer_count):
    B, Sr, H = response.shape
    _, Sp, _ = prompt.shape
    Bt = batch_tile
    assert B % Bt == 0, "batch_tile must divide the batch size"

    # Activations follow the (pre-cast) weight dtype; accumulation stays f32.
    compute_dtype = wq_t.dtype
    response = response.astype(compute_dtype)
    prompt = prompt.astype(compute_dtype)

    grid_spec = pltpu.PrefetchScalarGridSpec(
        num_scalar_prefetch=0,
        grid=(B // Bt,),
        in_specs=[
            pl.BlockSpec((Bt, Sr, H), lambda b: (b, 0, 0)),   # response tile
            pl.BlockSpec((Bt, Sp, H), lambda b: (b, 0, 0)),   # prompt tile
            _weight_spec((H, H), weight_buffer_count),        # Wq^T
            _weight_spec((1, H), weight_buffer_count),        # bq
            _weight_spec((H, 2 * H), weight_buffer_count),    # [Wk|Wv]^T
            _weight_spec((1, 2 * H), weight_buffer_count),    # [bk|bv]
        ],
        out_specs=pl.BlockSpec((Bt, Sr, H), lambda b: (b, 0, 0)),
    )

    return pl.pallas_call(
        _rpa_kernel,
        out_shape=jax.ShapeDtypeStruct((B, Sr, H), jnp.float32),
        grid_spec=grid_spec,
        compiler_params=pltpu.CompilerParams(
            dimension_semantics=("parallel",),
            vmem_limit_bytes=48 * 1024 * 1024,   # headroom under v7x's 64 MiB VMEM
        ),
    )(response, prompt, wq_t, bq, wkv_t, bkv)


def response_prompt_attention(response, prompt, prepared, *, batch_tile=None):
    """response: (B, Sr, H), prompt: (B, Sp, H). Returns (B, Sr, H) float32."""
    B, Sr, _ = response.shape
    Bt = batch_tile if batch_tile is not None else _default_batch_tile(B, Sr)
    args = (response, prompt, prepared["wq_t"], prepared["bq"],
            prepared["wkv_t"], prepared["bkv"])
    try:
        # Single-buffer the grid-invariant weight/bias blocks (saves VMEM).
        return _rpa_call(*args, batch_tile=Bt, weight_buffer_count=1)
    except Exception:
        # Fallback for jax versions without BlockSpec pipeline_mode / Buffered(1).
        return _rpa_call(*args, batch_tile=Bt, weight_buffer_count=None)


def prepare_params(params, compute_dtype=jnp.float32):
    """One-time (eager, outside jit) weight prep:
    pre-transpose to (H_in, H_out), fuse K|V, optionally cast weights to bf16.
    Biases stay f32 (they are added to the f32 accumulator)."""
    wq = jnp.asarray(params["wq"], jnp.float32)
    wk = jnp.asarray(params["wk"], jnp.float32)
    wv = jnp.asarray(params["wv"], jnp.float32)
    H = wq.shape[0]
    wq_t = wq.T.astype(compute_dtype)                                  # (H, H)
    wkv_t = jnp.concatenate([wk.T, wv.T], axis=1).astype(compute_dtype)  # (H, 2H)
    bq = jnp.asarray(params["bq"], jnp.float32).reshape(1, H)
    bkv = jnp.concatenate(
        [jnp.asarray(params["bk"], jnp.float32),
         jnp.asarray(params["bv"], jnp.float32)]).reshape(1, 2 * H)
    return {"wq_t": wq_t, "bq": bq, "wkv_t": wkv_t, "bkv": bkv}


def _reference(response, prompt, params):
    """Plain-JAX f32 reference matching the PyTorch forward."""
    H = response.shape[-1]
    z = response @ params["wq"].T + params["bq"]
    p = prompt @ params["wk"].T + params["bk"]
    v = prompt @ params["wv"].T + params["bv"]
    scores = jnp.einsum("bqh,bkh->bqk", z, p) / jnp.sqrt(jnp.float32(H))
    w = jax.nn.softmax(scores, axis=-1)
    return jnp.einsum("bqk,bkh->bqh", w, v)


def init_params(key, hidden_size):
    """Deterministic synthetic Linear params (PyTorch layout: weight (out,in), bias (out,))."""
    ks = jax.random.split(key, 6)
    bound = 1.0 / jnp.sqrt(jnp.float32(hidden_size))
    u = lambda k, shape: jax.random.uniform(k, shape, jnp.float32, -bound, bound)
    return {
        "wq": u(ks[0], (hidden_size, hidden_size)), "bq": u(ks[1], (hidden_size,)),
        "wk": u(ks[2], (hidden_size, hidden_size)), "bk": u(ks[3], (hidden_size,)),
        "wv": u(ks[4], (hidden_size, hidden_size)), "bv": u(ks[5], (hidden_size,)),
    }


if __name__ == "__main__":
    B, Sr, Sp, H = 2, 8, 8, 32
    key = jax.random.PRNGKey(0)
    k_resp, k_prm, k_par = jax.random.split(key, 3)

    response = jax.random.normal(k_resp, (B, Sr, H), jnp.float32)
    prompt = jax.random.normal(k_prm, (B, Sp, H), jnp.float32)
    params = init_params(k_par, H)

    ref = _reference(response, prompt, params)

    # f32 path (approx reciprocal -> slightly loosened tolerance).
    prep_f32 = prepare_params(params, jnp.float32)
    out_f32 = jax.block_until_ready(response_prompt_attention(response, prompt, prep_f32))
    assert out_f32.shape == (B, Sr, H)
    assert jnp.allclose(out_f32, ref, atol=5e-3, rtol=5e-3), "f32 kernel mismatch vs reference"

    # bf16 weights/activations path (f32 accumulation; looser tolerance).
    prep_bf16 = prepare_params(params, jnp.bfloat16)
    out_bf16 = jax.block_until_ready(response_prompt_attention(response, prompt, prep_bf16))
    assert out_bf16.shape == (B, Sr, H)
    assert jnp.allclose(out_bf16, ref, atol=5e-2, rtol=5e-2), "bf16 kernel mismatch vs reference"

    print("KERNEL_OK")
</pallas_src>

<mosaic_0001>
module attributes {stable_mosaic.version = 11 : i64} {
  func.func @_rpa_kernel(%arg0: i32, %arg1: memref<1x8x32xf32, #tpu.memory_space<vmem>>, %arg2: memref<1x8x32xf32, #tpu.memory_space<vmem>>, %arg3: memref<32x32xf32, #tpu.memory_space<vmem>>, %arg4: memref<1x32xf32, #tpu.memory_space<vmem>>, %arg5: memref<32x64xf32, #tpu.memory_space<vmem>>, %arg6: memref<1x64xf32, #tpu.memory_space<vmem>>, %arg7: memref<1x8x32xf32, #tpu.memory_space<vmem>>) attributes {dimension_semantics = [#tpu.dimension_semantics<parallel>], iteration_bounds = array<i64: 2>, scalar_prefetch = 0 : i64, scratch_operands = 0 : i64, tpu.core_type = #tpu.core_type<tc>, window_params = [{transform_indices = @transform_0, window_bounds = array<i64: 1, 8, 32>}, {transform_indices = @transform_1, window_bounds = array<i64: 1, 8, 32>}, {pipeline_mode = #tpu.pipeline_mode<synchronous>, transform_indices = @transform_2, window_bounds = array<i64: 32, 32>}, {pipeline_mode = #tpu.pipeline_mode<synchronous>, transform_indices = @transform_3, window_bounds = array<i64: 1, 32>}, {pipeline_mode = #tpu.pipeline_mode<synchronous>, transform_indices = @transform_4, window_bounds = array<i64: 32, 64>}, {pipeline_mode = #tpu.pipeline_mode<synchronous>, transform_indices = @transform_5, window_bounds = array<i64: 1, 64>}, {transform_indices = @transform_6, window_bounds = array<i64: 1, 8, 32>}]} {
    %c0 = arith.constant 0 : index
    %c0_0 = arith.constant 0 : index
    %c0_1 = arith.constant 0 : index
    %0 = vector.load %arg1[%c0, %c0_0, %c0_1] : memref<1x8x32xf32, #tpu.memory_space<vmem>>, vector<1x8x32xf32>
    %1 = vector.shape_cast %0 : vector<1x8x32xf32> to vector<8x32xf32>
    %c0_2 = arith.constant 0 : index
    %c0_3 = arith.constant 0 : index
    %c0_4 = arith.constant 0 : index
    %2 = vector.load %arg2[%c0_2, %c0_3, %c0_4] : memref<1x8x32xf32, #tpu.memory_space<vmem>>, vector<1x8x32xf32>
    %3 = vector.shape_cast %2 : vector<1x8x32xf32> to vector<8x32xf32>
    %c0_5 = arith.constant 0 : index
    %c0_6 = arith.constant 0 : index
    %4 = vector.load %arg3[%c0_5, %c0_6] : memref<32x32xf32, #tpu.memory_space<vmem>>, vector<32x32xf32>
    %cst = arith.constant dense<0.000000e+00> : vector<8x32xf32>
    %5 = tpu.matmul %1, %4, %cst {dimension_numbers = #tpu.dot_dimension_numbers<[1], [0], [0], [1], [0, 0, 1, 1], [], []>} : vector<8x32xf32>, vector<32x32xf32>, vector<8x32xf32> -> vector<8x32xf32>
    %c0_7 = arith.constant 0 : index
    %c0_8 = arith.constant 0 : index
    %6 = vector.load %arg4[%c0_7, %c0_8] : memref<1x32xf32, #tpu.memory_space<vmem>>, vector<1x32xf32>
    %7 = vector.broadcast %6 : vector<1x32xf32> to vector<8x32xf32>
    %8 = arith.addf %5, %7 : vector<8x32xf32>
    %c0_9 = arith.constant 0 : index
    %c0_10 = arith.constant 0 : index
    %9 = vector.load %arg5[%c0_9, %c0_10] : memref<32x64xf32, #tpu.memory_space<vmem>>, vector<32x64xf32>
    %cst_11 = arith.constant dense<0.000000e+00> : vector<8x64xf32>
    %10 = tpu.matmul %3, %9, %cst_11 {dimension_numbers = #tpu.dot_dimension_numbers<[1], [0], [0], [1], [0, 0, 1, 1], [], []>} : vector<8x32xf32>, vector<32x64xf32>, vector<8x64xf32> -> vector<8x64xf32>
    %c0_12 = arith.constant 0 : index
    %c0_13 = arith.constant 0 : index
    %11 = vector.load %arg6[%c0_12, %c0_13] : memref<1x64xf32, #tpu.memory_space<vmem>>, vector<1x64xf32>
    %12 = vector.broadcast %11 : vector<1x64xf32> to vector<8x64xf32>
    %13 = arith.addf %10, %12 : vector<8x64xf32>
    %14 = vector.shape_cast %8 : vector<8x32xf32> to vector<1x8x32xf32>
    %15 = vector.shape_cast %13 : vector<8x64xf32> to vector<1x8x64xf32>
    %16 = vector.extract_strided_slice %15 {offsets = [0, 0, 0], sizes = [1, 8, 32], strides = [1, 1, 1]} : vector<1x8x64xf32> to vector<1x8x32xf32>
    %17 = vector.extract_strided_slice %15 {offsets = [0, 0, 32], sizes = [1, 8, 32], strides = [1, 1, 1]} : vector<1x8x64xf32> to vector<1x8x32xf32>
    %cst_14 = arith.constant dense<0.000000e+00> : vector<1x8x8xf32>
    %18 = tpu.matmul %14, %16, %cst_14 {dimension_numbers = #tpu.dot_dimension_numbers<[2], [2], [1], [1], [0, 0, 0, 1, 1, 1], [0], [0]>} : vector<1x8x32xf32>, vector<1x8x32xf32>, vector<1x8x8xf32> -> vector<1x8x8xf32>
    %cst_15 = arith.constant 0.176776692 : f32
    %19 = vector.broadcast %cst_15 : f32 to vector<1x8x8xf32>
    %20 = arith.mulf %18, %19 : vector<1x8x8xf32>
    %cst_16 = arith.constant dense<0xFF800000> : vector<1x8xf32>
    %21 = vector.multi_reduction <maximumf>, %20, %cst_16 [2] : vector<1x8x8xf32> to vector<1x8xf32>
    %22 = vector.shape_cast %21 : vector<1x8xf32> to vector<1x8x1xf32>
    %23 = vector.broadcast %22 : vector<1x8x1xf32> to vector<1x8x8xf32>
    %24 = arith.subf %20, %23 : vector<1x8x8xf32>
    %25 = math.exp %24 : vector<1x8x8xf32>
    %cst_17 = arith.constant dense<0.000000e+00> : vector<1x8xf32>
    %26 = vector.multi_reduction <add>, %25, %cst_17 [2] : vector<1x8x8xf32> to vector<1x8xf32>
    %27 = vector.shape_cast %26 : vector<1x8xf32> to vector<1x8x1xf32>
    %28 = tpu.reciprocal %27 {approx = true} : vector<1x8x1xf32> -> vector<1x8x1xf32>
    %29 = vector.broadcast %28 : vector<1x8x1xf32> to vector<1x8x8xf32>
    %30 = arith.mulf %25, %29 : vector<1x8x8xf32>
    %cst_18 = arith.constant dense<0.000000e+00> : vector<1x8x32xf32>
    %31 = tpu.matmul %30, %17, %cst_18 {dimension_numbers = #tpu.dot_dimension_numbers<[2], [1], [1], [2], [0, 0, 0, 1, 1, 2], [0], [0]>} : vector<1x8x8xf32>, vector<1x8x32xf32>, vector<1x8x32xf32> -> vector<1x8x32xf32>
    %c0_19 = arith.constant 0 : index
    %c0_20 = arith.constant 0 : index
    %c0_21 = arith.constant 0 : index
    %32 = vector.load %arg7[%c0_19, %c0_20, %c0_21] : memref<1x8x32xf32, #tpu.memory_space<vmem>>, vector<1x8x32xf32>
    tpu.vector_store %arg7[%c0_19, %c0_20, %c0_21], %31 {strides = array<i32>} : memref<1x8x32xf32, #tpu.memory_space<vmem>>, vector<1x8x32xf32>,
    return
  }
  func.func @transform_0(%arg0: i32) -> (i32, i32, i32) {
    %c0_i32 = arith.constant 0 : i32
    %c0_i32_0 = arith.constant 0 : i32
    %c0_i32_1 = arith.constant 0 : i32
    return %arg0, %c0_i32, %c0_i32_0 : i32, i32, i32
  }
  func.func @transform_1(%arg0: i32) -> (i32, i32, i32) {
    %c0_i32 = arith.constant 0 : i32
    %c0_i32_0 = arith.constant 0 : i32
    %c0_i32_1 = arith.constant 0 : i32
    return %arg0, %c0_i32, %c0_i32_0 : i32, i32, i32
  }
  func.func @transform_2(%arg0: i32) -> (i32, i32) {
    %c0_i32 = arith.constant 0 : i32
    %c0_i32_0 = arith.constant 0 : i32
    %c0_i32_1 = arith.constant 0 : i32
    return %c0_i32, %c0_i32_0 : i32, i32
  }
  func.func @transform_3(%arg0: i32) -> (i32, i32) {
    %c0_i32 = arith.constant 0 : i32
    %c0_i32_0 = arith.constant 0 : i32
    %c0_i32_1 = arith.constant 0 : i32
    return %c0_i32, %c0_i32_0 : i32, i32
  }
  func.func @transform_4(%arg0: i32) -> (i32, i32) {
    %c0_i32 = arith.constant 0 : i32
    %c0_i32_0 = arith.constant 0 : i32
    %c0_i32_1 = arith.constant 0 : i32
    return %c0_i32, %c0_i32_0 : i32, i32
  }
  func.func @transform_5(%arg0: i32) -> (i32, i32) {
    %c0_i32 = arith.constant 0 : i32
    %c0_i32_0 = arith.constant 0 : i32
    %c0_i32_1 = arith.constant 0 : i32
    return %c0_i32, %c0_i32_0 : i32, i32
  }
  func.func @transform_6(%arg0: i32) -> (i32, i32, i32) {
    %c0_i32 = arith.constant 0 : i32
    %c0_i32_0 = arith.constant 0 : i32
    %c0_i32_1 = arith.constant 0 : i32
    return %arg0, %c0_i32, %c0_i32_0 : i32, i32, i32
  }
}

module attributes {stable_mosaic.version = 11 : i64} {
  func.func @_rpa_kernel(%arg0: i32, %arg1: memref<1x8x32xf32, #tpu.memory_space<vmem>>, %arg2: memref<1x8x32xf32, #tpu.memory_space<vmem>>, %arg3: memref<32x32xf32, #tpu.memory_space<vmem>>, %arg4: memref<1x32xf32, #tpu.memory_space<vmem>>, %arg5: memref<32x64xf32, #tpu.memory_space<vmem>>, %arg6: memref<1x64xf32, #tpu.memory_space<vmem>>, %arg7: memref<1x8x32xf32, #tpu.memory_space<vmem>>) attributes {dimension_semantics = [#tpu.dimension_semantics<parallel>], iteration_bounds = array<i64: 2>, scalar_prefetch = 0 : i64, scratch_operands = 0 : i64, tpu.core_type = #tpu.core_type<tc>, window_params = [{transform_indices = @transform_0, window_bounds = array<i64: 1, 8, 32>}, {transform_indices = @transform_1, window_bounds = array<i64: 1, 8, 32>}, {pipeline_mode = #tpu.pipeline_mode<synchronous>, transform_indices = @transform_2, window_bounds = array<i64: 32, 32>}, {pipeline_mode = #tpu.pipeline_mode<synchronous>, transform_indices = @transform_3, window_bounds = array<i64: 1, 32>}, {pipeline_mode = #tpu.pipeline_mode<synchronous>, transform_indices = @transform_4, window_bounds = array<i64: 32, 64>}, {pipeline_mode = #tpu.pipeline_mode<synchronous>, transform_indices = @transform_5, window_bounds = array<i64: 1, 64>}, {transform_indices = @transform_6, window_bounds = array<i64: 1, 8, 32>}]} {
    %c0 = arith.constant 0 : index
    %c0_0 = arith.constant 0 : index
    %c0_1 = arith.constant 0 : index
    %0 = vector.load %arg1[%c0, %c0_0, %c0_1] : memref<1x8x32xf32, #tpu.memory_space<vmem>>, vector<1x8x32xf32>
    %1 = vector.shape_cast %0 : vector<1x8x32xf32> to vector<8x32xf32>
    %c0_2 = arith.constant 0 : index
    %c0_3 = arith.constant 0 : index
    %c0_4 = arith.constant 0 : index
    %2 = vector.load %arg2[%c0_2, %c0_3, %c0_4] : memref<1x8x32xf32, #tpu.memory_space<vmem>>, vector<1x8x32xf32>
    %3 = vector.shape_cast %2 : vector<1x8x32xf32> to vector<8x32xf32>
    %c0_5 = arith.constant 0 : index
    %c0_6 = arith.constant 0 : index
    %4 = vector.load %arg3[%c0_5, %c0_6] : memref<32x32xf32, #tpu.memory_space<vmem>>, vector<32x32xf32>
    %cst = arith.constant dense<0.000000e+00> : vector<8x32xf32>
    %5 = tpu.matmul %1, %4, %cst {dimension_numbers = #tpu.dot_dimension_numbers<[1], [0], [0], [1], [0, 0, 1, 1], [], []>} : vector<8x32xf32>, vector<32x32xf32>, vector<8x32xf32> -> vector<8x32xf32>
    %c0_7 = arith.constant 0 : index
    %c0_8 = arith.constant 0 : index
    %6 = vector.load %arg4[%c0_7, %c0_8] : memref<1x32xf32, #tpu.memory_space<vmem>>, vector<1x32xf32>
    %7 = vector.broadcast %6 : vector<1x32xf32> to vector<8x32xf32>
    %8 = arith.addf %5, %7 : vector<8x32xf32>
    %c0_9 = arith.constant 0 : index
    %c0_10 = arith.constant 0 : index
    %9 = vector.load %arg5[%c0_9, %c0_10] : memref<32x64xf32, #tpu.memory_space<vmem>>, vector<32x64xf32>
    %cst_11 = arith.constant dense<0.000000e+00> : vector<8x64xf32>
    %10 = tpu.matmul %3, %9, %cst_11 {dimension_numbers = #tpu.dot_dimension_numbers<[1], [0], [0], [1], [0, 0, 1, 1], [], []>} : vector<8x32xf32>, vector<32x64xf32>, vector<8x64xf32> -> vector<8x64xf32>
    %c0_12 = arith.constant 0 : index
    %c0_13 = arith.constant 0 : index
    %11 = vector.load %arg6[%c0_12, %c0_13] : memref<1x64xf32, #tpu.memory_space<vmem>>, vector<1x64xf32>
    %12 = vector.broadcast %11 : vector<1x64xf32> to vector<8x64xf32>
    %13 = arith.addf %10, %12 : vector<8x64xf32>
    %14 = vector.shape_cast %8 : vector<8x32xf32> to vector<1x8x32xf32>
    %15 = vector.shape_cast %13 : vector<8x64xf32> to vector<1x8x64xf32>
    %16 = vector.extract_strided_slice %15 {offsets = [0, 0, 0], sizes = [1, 8, 32], strides = [1, 1, 1]} : vector<1x8x64xf32> to vector<1x8x32xf32>
    %17 = vector.extract_strided_slice %15 {offsets = [0, 0, 32], sizes = [1, 8, 32], strides = [1, 1, 1]} : vector<1x8x64xf32> to vector<1x8x32xf32>
    %cst_14 = arith.constant dense<0.000000e+00> : vector<1x8x8xf32>
    %18 = tpu.matmul %14, %16, %cst_14 {dimension_numbers = #tpu.dot_dimension_numbers<[2], [2], [1], [1], [0, 0, 0, 1, 1, 1], [0], [0]>} : vector<1x8x32xf32>, vector<1x8x32xf32>, vector<1x8x8xf32> -> vector<1x8x8xf32>
    %cst_15 = arith.constant 0.176776692 : f32
    %19 = vector.broadcast %cst_15 : f32 to vector<1x8x8xf32>
    %20 = arith.mulf %18, %19 : vector<1x8x8xf32>
    %cst_16 = arith.constant dense<0xFF800000> : vector<1x8xf32>
    %21 = vector.multi_reduction <maximumf>, %20, %cst_16 [2] : vector<1x8x8xf32> to vector<1x8xf32>
    %22 = vector.shape_cast %21 : vector<1x8xf32> to vector<1x8x1xf32>
    %23 = vector.broadcast %22 : vector<1x8x1xf32> to vector<1x8x8xf32>
    %24 = arith.subf %20, %23 : vector<1x8x8xf32>
    %25 = math.exp %24 : vector<1x8x8xf32>
    %cst_17 = arith.constant dense<0.000000e+00> : vector<1x8xf32>
    %26 = vector.multi_reduction <add>, %25, %cst_17 [2] : vector<1x8x8xf32> to vector<1x8xf32>
    %27 = vector.shape_cast %26 : vector<1x8xf32> to vector<1x8x1xf32>
    %28 = tpu.reciprocal %27 {approx = true} : vector<1x8x1xf32> -> vector<1x8x1xf32>
    %29 = vector.broadcast %28 : vector<1x8x1xf32> to vector<1x8x8xf32>
    %30 = arith.mulf %25, %29 : vector<1x8x8xf32>
    %cst_18 = arith.constant dense<0.000000e+00> : vector<1x8x32xf32>
    %31 = tpu.matmul %30, %17, %cst_18 {dimension_numbers = #tpu.dot_dimension_numbers<[2], [1], [1], [2], [0, 0, 0, 1, 1, 2], [0], [0]>} : vector<1x8x8xf32>, vector<1x8x32xf32>, vector<1x8x32xf32> -> vector<1x8x32xf32>
    %c0_19 = arith.constant 0 : index
    %c0_20 = arith.constant 0 : index
    %c0_21 = arith.constant 0 : index
    %32 = vector.load %arg7[%c0_19, %c0_20, %c0_21] : memref<1x8x32xf32, #tpu.memory_space<vmem>>, vector<1x8x32xf32>
    tpu.vector_store %arg7[%c0_19, %c0_20, %c0_21], %31 {strides = array<i32>} : memref<1x8x32xf32, #tpu.memory_space<vmem>>, vector<1x8x32xf32>,
    return
  }
  func.func @transform_0(%arg0: i32) -> (i32, i32, i32) {
    %c0_i32 = arith.constant 0 : i32
    %c0_i32_0 = arith.constant 0 : i32
    %c0_i32_1 = arith.constant 0 : i32
    return %arg0, %c0_i32, %c0_i32_0 : i32, i32, i32
  }
  func.func @transform_1(%arg0: i32) -> (i32, i32, i32) {
    %c0_i32 = arith.constant 0 : i32
    %c0_i32_0 = arith.constant 0 : i32
    %c0_i32_1 = arith.constant 0 : i32
    return %arg0, %c0_i32, %c0_i32_0 : i32, i32, i32
  }
  func.func @transform_2(%arg0: i32) -> (i32, i32) {
    %c0_i32 = arith.constant 0 : i32
    %c0_i32_0 = arith.constant 0 : i32
    %c0_i32_1 = arith.constant 0 : i32
    return %c0_i32, %c0_i32_0 : i32, i32
  }
  func.func @transform_3(%arg0: i32) -> (i32, i32) {
    %c0_i32 = arith.constant 0 : i32
    %c0_i32_0 = arith.constant 0 : i32
    %c0_i32_1 = arith.constant 0 : i32
    return %c0_i32, %c0_i32_0 : i32, i32
  }
  func.func @transform_4(%arg0: i32) -> (i32, i32) {
    %c0_i32 = arith.constant 0 : i32
    %c0_i32_0 = arith.constant 0 : i32
    %c0_i32_1 = arith.constant 0 : i32
    return %c0_i32, %c0_i32_0 : i32, i32
  }
  func.func @transform_5(%arg0: i32) -> (i32, i32) {
    %c0_i32 = arith.constant 0 : i32
    %c0_i32_0 = arith.constant 0 : i32
    %c0_i32_1 = arith.constant 0 : i32
    return %c0_i32, %c0_i32_0 : i32, i32
  }
  func.func @transform_6(%arg0: i32) -> (i32, i32, i32) {
    %c0_i32 = arith.constant 0 : i32
    %c0_i32_0 = arith.constant 0 : i32
    %c0_i32_1 = arith.constant 0 : i32
    return %arg0, %c0_i32, %c0_i32_0 : i32, i32, i32
  }
}

</mosaic_0001>

<llo_original>
// kernel: _rpa_call.1
$region0: #{_rpa_call.1}
  #allocation0 [shape = 'u32[]', space=smem, size = 0x4, offset = 0x4, fixed_abs, tag = 'smem constant byte address 0x4 - core index']
  #allocation1 [shape = 'u32[144,128]{1,0:T(1,128)}', space=vmem, size = 0x12000, scoped, tag = 'internal scratch']
  %s0 = inlined_call_operand.hbm [shape: f32[2,8,32], index: 0, kind: input, shape index: {}]
  %s1 = inlined_call_operand.hbm [shape: f32[2,8,32], index: 1, kind: input, shape index: {}]
  %s2 = inlined_call_operand.hbm [shape: f32[32,32], index: 2, kind: input, shape index: {}]
  %s3 = inlined_call_operand.vmem [shape: f32[1,32], index: 3, kind: input, shape index: {}]
  %s4 = inlined_call_operand.hbm [shape: f32[32,64], index: 4, kind: input, shape index: {}]
  %s5 = inlined_call_operand.vmem [shape: f32[1,64], index: 5, kind: input, shape index: {}]
  %s6 = inlined_call_operand.hbm [shape: f32[2,8,32], index: 6, kind: output, shape index: {}]
  %s7 = sld [smem:[#allocation0]]
  $region73: #{_rpa_call.1} parent=0
    _
  %s9 = ssub.s32 1, %s7
  %s10 = scalar_select 0, %s9, %s7
  $region1: #{_rpa_call.1} parent=0
    #allocation2 [shape = 'u8[8192]{0}', space=vmem, size = 0x2000, scoped, tag = 'input window, operand 0']
    #allocation3 [shape = 's32[2]{0}', space=sflag, size = 0x8, scoped, tag = 'scoped memory for _rpa_call.1']
    #allocation4 [shape = 's32[2]{0}', space=sflag, size = 0x8, scoped, tag = 'scoped memory for _rpa_call.1']
    #allocation5 [shape = 'u8[8192]{0}', space=vmem, size = 0x2000, scoped, tag = 'input window, operand 1']
    #allocation6 [shape = 's32[2]{0}', space=sflag, size = 0x8, scoped, tag = 'scoped memory for _rpa_call.1']
    #allocation7 [shape = 'u8[16384]{0}', space=vmem, size = 0x4000, scoped, tag = 'input window, operand 2, single buffered']
    #allocation8 [shape = 'u8[16384]{0}', space=vmem, size = 0x4000, scoped, tag = 'input window, operand 4, single buffered']
    #allocation9 [shape = 's32[1]{0}', space=sflag, size = 0x4, scoped, tag = 'scoped memory for _rpa_call.1']
    #allocation10 [shape = 'u8[8192]{0}', space=vmem, size = 0x2000, scoped, tag = 'output window, operand 0']
    %11 = vsyncpa [#allocation3], 0
    %s12 = scalar_lea.sflag [#allocation3], 1
    %13 = vsyncpa %s12, 0
    %14 = vsyncpa [#allocation6], 0
    %s15 = scalar_lea.sflag [#allocation6], 1
    %16 = vsyncpa %s15, 0
    %17 = vsyncpa [#allocation9], 0
    %18 = vsyncpa [#allocation4], 0
    %s19 = scalar_lea.sflag [#allocation4], 1
    %20 = vsyncpa %s19, 0
    loop: start=0, step=1, limit=4
    $region2: #{_rpa_call.1} parent=1 // loop_pre_header
      _
    $region3: #{_rpa_call.1} parent=1 // loop_header
      %s22 = sphi 0, %s26
      %p23 = scmp.ge.s32.totalorder %s22, 4
      %s32 = sphi 0, %s34
      %s35 = sphi 0, %s32
      %s36 = sphi 0, %s35
      %s52 = sphi 0, %s36
      %s58 = sphi 0, %s60
      %s61 = sphi 0, %s58
      %s62 = sphi 0, %s61
      %s78 = sphi 0, %s62
      %s82 = sphi 0, %s82
      %s84 = sphi 0, %s82
      %s85 = sphi 0, %s84
      %s99 = sphi 0, %s85
      %s103 = sphi 0, %s103
      %s105 = sphi 0, %s103
      %s106 = sphi 0, %s105
      %s120 = sphi 0, %s106
      %s124 = sphi 0, %s124
      %s126 = sphi 0, %s124
      %s127 = sphi 0, %s126
      %s141 = sphi 0, %s127
      %s145 = sphi 0, %s145
      %s147 = sphi 0, %s145
      %s148 = sphi 0, %s147
      %s162 = sphi 0, %s148
      %s168 = sphi 0, %s170
      %s171 = sphi 0, %s168
      %s172 = sphi 0, %s171
      %s188 = sphi 0, %s172
    $region4: #{_rpa_call.1} parent=1 // loop_header_branch
      %25 = sbr.rel (%p23) target = $region8
    $region5: #{_rpa_call.1} parent=1 // loop_body
      %s27 = ssub.s32 %s22, 1
      %s28 = ssub.s32 %s22, 2
      %s29 = sadd.s32 %s22, 1
      %s30 = ssub.s32 %s22, %s29
      %p31 = scmp.eq.s32.totalorder %s30, 0
      %s33 = sadd.s32 %s32, 1
      %s34 = scalar_select %p31, %s32, %s33
      %p37 = pneg %p31
      %p38 = scmp.eq.s32.totalorder %s22, 1
      %p39 = por %p37, %p38
      %p40 = scmp.ne.s32.totalorder %s32, %s35
      %p41 = scmp.eq.s32.totalorder %s22, 0
      %p42 = por %p40, %p41
      %p43 = scmp.ne.s32.totalorder %s32, %s35
      %p44 = scmp.eq.s32.totalorder %s27, 1
      %p45 = por %p43, %p44
      %p46 = scmp.ne.s32.totalorder %s35, %s36
      %p47 = scmp.eq.s32.totalorder %s27, 0
      %p48 = por %p46, %p47
      %p49 = scmp.ne.s32.totalorder %s35, %s36
      %p50 = scmp.eq.s32.totalorder %s28, 1
      %p51 = por %p49, %p50
      %p53 = scmp.ne.s32.totalorder %s36, %s52
      %p54 = scmp.eq.s32.totalorder %s28, 0
      %p55 = por %p53, %p54
      %s56 = ssub.s32 %s22, %s29
      %p57 = scmp.eq.s32.totalorder %s56, 0
      %s59 = sadd.s32 %s58, 1
      %s60 = scalar_select %p57, %s58, %s59
      %p63 = pneg %p57
      %p64 = scmp.eq.s32.totalorder %s22, 1
      %p65 = por %p63, %p64
      %p66 = scmp.ne.s32.totalorder %s58, %s61
      %p67 = scmp.eq.s32.totalorder %s22, 0
      %p68 = por %p66, %p67
      %p69 = scmp.ne.s32.totalorder %s58, %s61
      %p70 = scmp.eq.s32.totalorder %s27, 1
      %p71 = por %p69, %p70
      %p72 = scmp.ne.s32.totalorder %s61, %s62
      %p73 = scmp.eq.s32.totalorder %s27, 0
      %p74 = por %p72, %p73
      %p75 = scmp.ne.s32.totalorder %s61, %s62
      %p76 = scmp.eq.s32.totalorder %s28, 1
      %p77 = por %p75, %p76
      %p79 = scmp.ne.s32.totalorder %s62, %s78
      %p80 = scmp.eq.s32.totalorder %s28, 0
      %p81 = por %p79, %p80
      %s83 = sadd.s32 %s82, 1
      %p86 = scmp.eq.s32.totalorder %s22, 1
      %p87 = scmp.ne.s32.totalorder %s82, %s84
      %p88 = scmp.eq.s32.totalorder %s22, 0
      %p89 = por %p87, %p88
      %p90 = scmp.ne.s32.totalorder %s82, %s84
      %p91 = scmp.eq.s32.totalorder %s27, 1
      %p92 = por %p90, %p91
      %p93 = scmp.ne.s32.totalorder %s84, %s85
      %p94 = scmp.eq.s32.totalorder %s27, 0
      %p95 = por %p93, %p94
      %p96 = scmp.ne.s32.totalorder %s84, %s85
      %p97 = scmp.eq.s32.totalorder %s28, 1
      %p98 = por %p96, %p97
      %p100 = scmp.ne.s32.totalorder %s85, %s99
      %p101 = scmp.eq.s32.totalorder %s28, 0
      %p102 = por %p100, %p101
      %s104 = sadd.s32 %s103, 1
      %p107 = scmp.eq.s32.totalorder %s22, 1
      %p108 = scmp.ne.s32.totalorder %s103, %s105
      %p109 = scmp.eq.s32.totalorder %s22, 0
      %p110 = por %p108, %p109
      %p111 = scmp.ne.s32.totalorder %s103, %s105
      %p112 = scmp.eq.s32.totalorder %s27, 1
      %p113 = por %p111, %p112
      %p114 = scmp.ne.s32.totalorder %s105, %s106
      %p115 = scmp.eq.s32.totalorder %s27, 0
      %p116 = por %p114, %p115
      %p117 = scmp.ne.s32.totalorder %s105, %s106
      %p118 = scmp.eq.s32.totalorder %s28, 1
      %p119 = por %p117, %p118
      %p121 = scmp.ne.s32.totalorder %s106, %s120
      %p122 = scmp.eq.s32.totalorder %s28, 0
      %p123 = por %p121, %p122
      %s125 = sadd.s32 %s124, 1
      %p128 = scmp.eq.s32.totalorder %s22, 1
      %p129 = scmp.ne.s32.totalorder %s124, %s126
      %p130 = scmp.eq.s32.totalorder %s22, 0
      %p131 = por %p129, %p130
      %p132 = scmp.ne.s32.totalorder %s124, %s126
      %p133 = scmp.eq.s32.totalorder %s27, 1
      %p134 = por %p132, %p133
      %p135 = scmp.ne.s32.totalorder %s126, %s127
      %p136 = scmp.eq.s32.totalorder %s27, 0
      %p137 = por %p135, %p136
      %p138 = scmp.ne.s32.totalorder %s126, %s127
      %p139 = scmp.eq.s32.totalorder %s28, 1
      %p140 = por %p138, %p139
      %p142 = scmp.ne.s32.totalorder %s127, %s141
      %p143 = scmp.eq.s32.totalorder %s28, 0
      %p144 = por %p142, %p143
      %s146 = sadd.s32 %s145, 1
      %p149 = scmp.eq.s32.totalorder %s22, 1
      %p150 = scmp.ne.s32.totalorder %s145, %s147
      %p151 = scmp.eq.s32.totalorder %s22, 0
      %p152 = por %p150, %p151
      %p153 = scmp.ne.s32.totalorder %s145, %s147
      %p154 = scmp.eq.s32.totalorder %s27, 1
      %p155 = por %p153, %p154
      %p156 = scmp.ne.s32.totalorder %s147, %s148
      %p157 = scmp.eq.s32.totalorder %s27, 0
      %p158 = por %p156, %p157
      %p159 = scmp.ne.s32.totalorder %s147, %s148
      %p160 = scmp.eq.s32.totalorder %s28, 1
      %p161 = por %p159, %p160
      %p163 = scmp.ne.s32.totalorder %s148, %s162
      %p164 = scmp.eq.s32.totalorder %s28, 0
      %p165 = por %p163, %p164
      %s166 = ssub.s32 %s22, %s29
      %p167 = scmp.eq.s32.totalorder %s166, 0
      %s169 = sadd.s32 %s168, 1
      %s170 = scalar_select %p167, %s168, %s169
      %p173 = pneg %p167
      %p174 = scmp.eq.s32.totalorder %s22, 1
      %p175 = por %p173, %p174
      %p176 = scmp.ne.s32.totalorder %s168, %s171
      %p177 = scmp.eq.s32.totalorder %s22, 0
      %p178 = por %p176, %p177
      %p179 = scmp.ne.s32.totalorder %s168, %s171
      %p180 = scmp.eq.s32.totalorder %s27, 1
      %p181 = por %p179, %p180
      %p182 = scmp.ne.s32.totalorder %s171, %s172
      %p183 = scmp.eq.s32.totalorder %s27, 0
      %p184 = por %p182, %p183
      %p185 = scmp.ne.s32.totalorder %s171, %s172
      %p186 = scmp.eq.s32.totalorder %s28, 1
      %p187 = por %p185, %p186
      %p189 = scmp.ne.s32.totalorder %s172, %s188
      %p190 = scmp.eq.s32.totalorder %s28, 0
      %p191 = por %p189, %p190
      %p192 = scmp.le.s32.totalorder 1, %s22
      %p193 = scmp.lt.s32.totalorder %s22, 3
      %p194 = pnand %p192, %p193
      %p195 = pneg %p194
      // Predicated region
      $region9: #{_rpa_call.1} parent=5 // pred_check
        _
      $region10: #{_rpa_call.1} parent=5 // pred_check_branch
        %197 = sbr.rel (%p194) target = $region12
      $region11: #{_rpa_call.1} parent=5 // pred_region
        %s198 = ssub.s32 %s22, 1
        // Predicated region
        $region13: #{_rpa_call.1} parent=11 // pred_check
          %p199 = pneg %p95
        $region14: #{_rpa_call.1} parent=11 // pred_check_branch
          %201 = sbr.rel (%p199) target = $region16
        $region15: #{_rpa_call.1} parent=11 // pred_region
          %s203 = ssub.s32 512, 512
          %204 = vsyncadd [#allocation6], %s203
          %s205 = sshll.u32 [#allocation7], 4
          %s206 = int_to_ptr.vmem [resolvable:$true] %s205
          %211 = dma.hbm_to_vmem [thread:$0]  %s2, 512, %s206, [#allocation6], 128, 128, 8
        $region16: #{_rpa_call.1} parent=11 // pred_fallthru
          _
        // Predicated region
        $region17: #{_rpa_call.1} parent=11 // pred_check
          %p212 = pneg %p116
        $region18: #{_rpa_call.1} parent=11 // pred_check_branch
          %214 = sbr.rel (%p212) target = $region20
        $region19: #{_rpa_call.1} parent=11 // pred_region
          _
        $region20: #{_rpa_call.1} parent=11 // pred_fallthru
          _
        // Predicated region
        $region21: #{_rpa_call.1} parent=11 // pred_check
          %p215 = pneg %p137
        $region22: #{_rpa_call.1} parent=11 // pred_check_branch
          %217 = sbr.rel (%p215) target = $region24
        $region23: #{_rpa_call.1} parent=11 // pred_region
          %s219 = ssub.s32 512, 512
          %220 = vsyncadd [#allocation9], %s219
          %s221 = sshll.u32 [#allocation8], 4
          %s222 = int_to_ptr.vmem [resolvable:$true] %s221
          %227 = dma.hbm_to_vmem [thread:$0]  %s4, 512, %s222, [#allocation9], 128, 128, 8
        $region24: #{_rpa_call.1} parent=11 // pred_fallthru
          _
        // Predicated region
        $region25: #{_rpa_call.1} parent=11 // pred_check
          %p228 = pneg %p158
        $region26: #{_rpa_call.1} parent=11 // pred_check_branch
          %230 = sbr.rel (%p228) target = $region28
        $region27: #{_rpa_call.1} parent=11 // pred_region
          _
        $region28: #{_rpa_call.1} parent=11 // pred_fallthru
          _
      $region12: #{_rpa_call.1} parent=5 // pred_fallthru
        _
      %p231 = scmp.lt.s32.totalorder %s22, 2
      // Predicated region
      $region29: #{_rpa_call.1} parent=5 // pred_check
        %p232 = pneg %p231
      $region30: #{_rpa_call.1} parent=5 // pred_check_branch
        %234 = sbr.rel (%p232) target = $region32
      $region31: #{_rpa_call.1} parent=5 // pred_region
        // Predicated region
        $region33: #{_rpa_call.1} parent=31 // pred_check
          %p235 = pneg %p42
        $region34: #{_rpa_call.1} parent=31 // pred_check_branch
          %237 = sbr.rel (%p235) target = $region36
        $region35: #{_rpa_call.1} parent=31 // pred_region
          %s238 = sand.u32 %s32, 1
          %s239 = scalar_lea.sflag [#allocation3], %s238
          %s240 = sand.u32 %s32, 1
          %s241 = smul.addr %s240, 8
          %s242 = scalar_lea.vmem [#allocation2], %s241
          %s244 = ssub.s32 128, 128
          %245 = vsyncadd %s239, %s244
          %s246 = smul.addr %s22, 128
          %s247 = scalar_lea.hbm %s0, %s246
          %s249 = sshll.u32 %s242, 4
          %s250 = int_to_ptr.vmem [resolvable:$true] %s249
          %252 = dma.hbm_to_vmem [thread:$0]  %s247, 128, %s250, %s239
        $region36: #{_rpa_call.1} parent=31 // pred_fallthru
          _
        // Predicated region
        $region37: #{_rpa_call.1} parent=31 // pred_check
          %p253 = pneg %p68
        $region38: #{_rpa_call.1} parent=31 // pred_check_branch
          %255 = sbr.rel (%p253) target = $region40
        $region39: #{_rpa_call.1} parent=31 // pred_region
          %s256 = sand.u32 %s22, 1
          %s257 = scalar_lea.sflag [#allocation6], %s256
          %s258 = sand.u32 %s58, 1
          %s259 = smul.addr %s258, 8
          %s260 = scalar_lea.vmem [#allocation5], %s259
          %s262 = ssub.s32 128, 128
          %263 = vsyncadd %s257, %s262
          %s264 = smul.addr %s22, 128
          %s265 = scalar_lea.hbm %s1, %s264
          %s267 = sshll.u32 %s260, 4
          %s268 = int_to_ptr.vmem [resolvable:$true] %s267
          %270 = dma.hbm_to_vmem [thread:$0]  %s265, 128, %s268, %s257
        $region40: #{_rpa_call.1} parent=31 // pred_fallthru
          _
      $region32: #{_rpa_call.1} parent=5 // pred_fallthru
        _
      %p271 = scmp.le.s32.totalorder 1, %s22
      %p272 = scmp.lt.s32.totalorder %s22, 3
      %p273 = pnand %p271, %p272
      %p274 = pneg %p273
      // Predicated region
      $region41: #{_rpa_call.1} parent=5 // pred_check
        _
      $region42: #{_rpa_call.1} parent=5 // pred_check_branch
        %276 = sbr.rel (%p273) target = $region44
      $region43: #{_rpa_call.1} parent=5 // pred_region
        %s277 = ssub.s32 %s22, 1
        %s278 = sand.u32 %s35, 1
        %s279 = scalar_lea.sflag [#allocation3], %s278
        %s280 = sand.u32 %s35, 1
        %s281 = smul.addr %s280, 8
        %s282 = scalar_lea.vmem [#allocation2], %s281
        // Predicated region
        $region45: #{_rpa_call.1} parent=43 // pred_check
          %p283 = pneg %p48
        $region46: #{_rpa_call.1} parent=43 // pred_check_branch
          %285 = sbr.rel (%p283) target = $region48
        $region47: #{_rpa_call.1} parent=43 // pred_region
          %286 = dma.done %s279, 128
        $region48: #{_rpa_call.1} parent=43 // pred_fallthru
          _
        %s287 = sand.u32 %s27, 1
        %s288 = scalar_lea.sflag [#allocation6], %s287
        %s289 = sand.u32 %s61, 1
        %s290 = smul.addr %s289, 8
        %s291 = scalar_lea.vmem [#allocation5], %s290
        // Predicated region
        $region49: #{_rpa_call.1} parent=43 // pred_check
          %p292 = pneg %p74
        $region50: #{_rpa_call.1} parent=43 // pred_check_branch
          %294 = sbr.rel (%p292) target = $region52
        $region51: #{_rpa_call.1} parent=43 // pred_region
          %295 = dma.done %s288, 128
        $region52: #{_rpa_call.1} parent=43 // pred_fallthru
          _
        // Predicated region
        $region53: #{_rpa_call.1} parent=43 // pred_check
          %p296 = pneg %p95
        $region54: #{_rpa_call.1} parent=43 // pred_check_branch
          %298 = sbr.rel (%p296) target = $region56
        $region55: #{_rpa_call.1} parent=43 // pred_region
          %299 = dma.done [#allocation6], 512
        $region56: #{_rpa_call.1} parent=43 // pred_fallthru
          _
        // Predicated region
        $region57: #{_rpa_call.1} parent=43 // pred_check
          %p300 = pneg %p137
        $region58: #{_rpa_call.1} parent=43 // pred_check_branch
          %302 = sbr.rel (%p300) target = $region60
        $region59: #{_rpa_call.1} parent=43 // pred_region
          %303 = dma.done [#allocation9], 512
        $region60: #{_rpa_call.1} parent=43 // pred_fallthru
          _
        %s304 = sand.u32 %s35, 1
        %s305 = scalar_lea.sflag [#allocation3], %s304
        %s306 = sand.u32 %s35, 1
        %s307 = smul.addr %s306, 8
        %s308 = scalar_lea.vmem [#allocation2], %s307
        %p309 = pneg %p48
        %p310 = pneg %p45
        %s311 = sand.u32 %s27, 1
        %s312 = scalar_lea.sflag [#allocation6], %s311
        %s313 = sand.u32 %s61, 1
        %s314 = smul.addr %s313, 8
        %s315 = scalar_lea.vmem [#allocation5], %s314
        %p316 = pneg %p74
        %p317 = pneg %p71
        %p318 = pneg %p95
        %p319 = pneg %p92
        %p320 = pneg %p116
        %p321 = pneg %p113
        %p322 = pneg %p137
        %p323 = pneg %p134
        %p324 = pneg %p158
        %p325 = pneg %p155
        %p326 = pneg %p184
        %p327 = pneg %p181
        %s328 = sand.u32 %s171, 1
        %s329 = scalar_lea.sflag [#allocation4], %s328
        %s330 = sand.u32 %s171, 1
        %s331 = smul.addr %s330, 8
        %s332 = scalar_lea.vmem [#allocation10], %s331
        %v333 = vld [vmem:[%s282] sm:$0xff]
        %v334 = vld [vmem:[%s291] sm:$0xff]
        %v335 = vld [vmem:[#allocation7] sm:$0xff]
        %v336 = vld [vmem:[#allocation7 + $0x8] sm:$0xff]
        %v337 = vld [vmem:[#allocation7 + $0x10] sm:$0xff]
        %v338 = vld [vmem:[#allocation7 + $0x18] sm:$0xff]
        %v339 = vld [vmem:[%s3] sm:$0x1]
        %v341 = vlaneseq
        %v342 = vshrl.u32 %v341, 7
        %v343 = vsub.s32 0, %v342
        %v344 = vrot.slane %v339, %v343
        %vm346 = vcmask 261120
        %v348 = vsel %vm346, %v333, 0
        %350 = vmatprep.subr.mxu0 0.0
        %351 = vmatpush1.msra.mxu0 %v335
        %352 = vmatprep.subr.mxu0 0.0
        %353 = vmatpush1.msra.mxu0 %v336
        %354 = vmatprep.subr.mxu0 0.0
        %355 = vmatpush1.msra.mxu0 %v337
        %356 = vmatprep.subr.mxu0 0.0
        %357 = vmatpush1.msra.mxu0 %v338
        %358 = vmatprep.subr.mxu0 0.0
        %359 = vmatpush1.msra.mxu0 0.0
        %360 = vmatprep.subr.mxu0 0.0
        %361 = vmatpush1.msra.mxu0 0.0
        %362 = vmatprep.subr.mxu0 0.0
        %363 = vmatpush1.msra.mxu0 0.0
        %364 = vmatprep.subr.mxu0 0.0
        %365 = vmatpush1.msra.mxu0 0.0
        %366 = vmatprep.subr.mxu0 0.0
        %367 = vmatpush1.msra.mxu0 0.0
        %368 = vmatprep.subr.mxu0 0.0
        %369 = vmatpush1.msra.mxu0 0.0
        %370 = vmatprep.subr.mxu0 0.0
        %371 = vmatpush1.msra.mxu0 0.0
        %372 = vmatprep.subr.mxu0 0.0
        %373 = vmatpush1.msra.mxu0 0.0
        %374 = vmatprep.subr.mxu0 0.0
        %375 = vmatpush1.msra.mxu0 0.0
        %376 = vmatprep.subr.mxu0 0.0
        %377 = vmatpush1.msra.mxu0 0.0
        %378 = vmatprep.subr.mxu0 0.0
        %379 = vmatpush1.msra.mxu0 0.0
        %380 = vmatprep.subr.mxu0 0.0
        %381 = vmatpush1.msra.mxu0 0.0
        %382 = vmatprep.subr.mxu0 0.0
        %383 = vmatpush1.msra.mxu0 0.0
        %384 = vmatprep.subr.mxu0 0.0
        %385 = vmatpush1.msra.mxu0 0.0
        %386 = vmatprep.subr.mxu0 0.0
        %387 = vmatpush1.msra.mxu0 0.0
        %388 = vmatprep.subr.mxu0 0.0
        %389 = vmatpush1.msra.mxu0 0.0
        %390 = vmatprep.subr.mxu0 0.0
        %391 = vmatpush1.msra.mxu0 0.0
        %392 = vmatprep.subr.mxu0 0.0
        %393 = vmatpush1.msra.mxu0 0.0
        %394 = vmatprep.subr.mxu0 0.0
        %395 = vmatpush1.msra.mxu0 0.0
        %396 = vmatprep.subr.mxu0 0.0
        %397 = vmatpush1.msra.mxu0 0.0
        %398 = vmatprep.subr.mxu0 0.0
        %399 = vmatpush1.msra.mxu0 0.0
        %400 = vmatprep.subr.mxu0 0.0
        %401 = vmatpush1.msra.mxu0 0.0
        %402 = vmatprep.subr.mxu0 0.0
        %403 = vmatpush1.msra.mxu0 0.0
        %404 = vmatprep.subr.mxu0 0.0
        %405 = vmatpush1.msra.mxu0 0.0
        %406 = vmatprep.subr.mxu0 0.0
        %407 = vmatpush1.msra.mxu0 0.0
        %408 = vmatprep.subr.mxu0 0.0
        %409 = vmatpush1.msra.mxu0 0.0
        %410 = vmatprep.subr.mxu0 0.0
        %411 = vmatpush1.msra.mxu0 0.0
        %412 = vmatprep.subr.mxu0 0.0
        %413 = vmatpush1.msra.mxu0 0.0
        %414 = vmatprep.mubr.f32.mxu0 0.0
        %415 = vmatmul.mubr.f32.gmra.mrb[0].mxu0 %v348
        %v416 = vpop.f32.mrb[0].mxu0
        %v417 = vadd.f32 %v344, %v416
        %v418 = vpop.f32.mrb[0].mxu0
        %419 = vdwg.mxu0
        %v420 = vld [vmem:[#allocation8] sm:$0xff]
        %v421 = vld [vmem:[#allocation8 + $0x8] sm:$0xff]
        %v422 = vld [vmem:[#allocation8 + $0x10] sm:$0xff]
        %v423 = vld [vmem:[#allocation8 + $0x18] sm:$0xff]
        %v424 = vld [vmem:[%s5] sm:$0x1]
        %v426 = vlaneseq
        %v427 = vshrl.u32 %v426, 7
        %v428 = vsub.s32 0, %v427
        %v429 = vrot.slane %v424, %v428
        %v432 = vsel %vm346, %v334, 0
        %434 = vmatprep.subr.mxu0 0.0
        %435 = vmatpush1.msra.mxu0 %v420
        %436 = vmatprep.subr.mxu0 0.0
        %437 = vmatpush1.msra.mxu0 %v421
        %438 = vmatprep.subr.mxu0 0.0
        %439 = vmatpush1.msra.mxu0 %v422
        %440 = vmatprep.subr.mxu0 0.0
        %441 = vmatpush1.msra.mxu0 %v423
        %442 = vmatprep.subr.mxu0 0.0
        %443 = vmatpush1.msra.mxu0 0.0
        %444 = vmatprep.subr.mxu0 0.0
        %445 = vmatpush1.msra.mxu0 0.0
        %446 = vmatprep.subr.mxu0 0.0
        %447 = vmatpush1.msra.mxu0 0.0
        %448 = vmatprep.subr.mxu0 0.0
        %449 = vmatpush1.msra.mxu0 0.0
        %450 = vmatprep.subr.mxu0 0.0
        %451 = vmatpush1.msra.mxu0 0.0
        %452 = vmatprep.subr.mxu0 0.0
        %453 = vmatpush1.msra.mxu0 0.0
        %454 = vmatprep.subr.mxu0 0.0
        %455 = vmatpush1.msra.mxu0 0.0
        %456 = vmatprep.subr.mxu0 0.0
        %457 = vmatpush1.msra.mxu0 0.0
        %458 = vmatprep.subr.mxu0 0.0
        %459 = vmatpush1.msra.mxu0 0.0
        %460 = vmatprep.subr.mxu0 0.0
        %461 = vmatpush1.msra.mxu0 0.0
        %462 = vmatprep.subr.mxu0 0.0
        %463 = vmatpush1.msra.mxu0 0.0
        %464 = vmatprep.subr.mxu0 0.0
        %465 = vmatpush1.msra.mxu0 0.0
        %466 = vmatprep.subr.mxu0 0.0
        %467 = vmatpush1.msra.mxu0 0.0
        %468 = vmatprep.subr.mxu0 0.0
        %469 = vmatpush1.msra.mxu0 0.0
        %470 = vmatprep.subr.mxu0 0.0
        %471 = vmatpush1.msra.mxu0 0.0
        %472 = vmatprep.subr.mxu0 0.0
        %473 = vmatpush1.msra.mxu0 0.0
        %474 = vmatprep.subr.mxu0 0.0
        %475 = vmatpush1.msra.mxu0 0.0
        %476 = vmatprep.subr.mxu0 0.0
        %477 = vmatpush1.msra.mxu0 0.0
        %478 = vmatprep.subr.mxu0 0.0
        %479 = vmatpush1.msra.mxu0 0.0
        %480 = vmatprep.subr.mxu0 0.0
        %481 = vmatpush1.msra.mxu0 0.0
        %482 = vmatprep.subr.mxu0 0.0
        %483 = vmatpush1.msra.mxu0 0.0
        %484 = vmatprep.subr.mxu0 0.0
        %485 = vmatpush1.msra.mxu0 0.0
        %486 = vmatprep.subr.mxu0 0.0
        %487 = vmatpush1.msra.mxu0 0.0
        %488 = vmatprep.subr.mxu0 0.0
        %489 = vmatpush1.msra.mxu0 0.0
        %490 = vmatprep.subr.mxu0 0.0
        %491 = vmatpush1.msra.mxu0 0.0
        %492 = vmatprep.subr.mxu0 0.0
        %493 = vmatpush1.msra.mxu0 0.0
        %494 = vmatprep.subr.mxu0 0.0
        %495 = vmatpush1.msra.mxu0 0.0
        %496 = vmatprep.subr.mxu0 0.0
        %497 = vmatpush1.msra.mxu0 0.0
        %498 = vmatprep.mubr.f32.mxu0 0.0
        %499 = vmatmul.mubr.f32.gmra.mrb[0].mxu0 %v432
        %v500 = vpop.f32.mrb[0].mxu0
        %v501 = vadd.f32 %v429, %v500
        %v502 = vpop.f32.mrb[0].mxu0
        %503 = vdwg.mxu0
        %v505 = vsel %vm346, %v417, 0
        %v508 = vsel %vm346, %v501, 0
        %510 = vmatprep.subr.mxu0 0.0
        %511 = vmatpush1.xpose.msra.mxu0 %v508
        %512 = vmatprep.subr.mxu0 0.0
        %513 = vmatpush1.xpose.msra.mxu0 0.0
        %514 = vmatprep.subr.mxu0 0.0
        %515 = vmatpush1.xpose.msra.mxu0 0.0
        %516 = vmatprep.subr.mxu0 0.0
        %517 = vmatpush1.xpose.msra.mxu0 0.0
        %518 = vmatprep.subr.mxu0 0.0
        %519 = vmatpush1.xpose.msra.mxu0 0.0
        %520 = vmatprep.subr.mxu0 0.0
        %521 = vmatpush1.xpose.msra.mxu0 0.0
        %522 = vmatprep.subr.mxu0 0.0
        %523 = vmatpush1.xpose.msra.mxu0 0.0
        %524 = vmatprep.subr.mxu0 0.0
        %525 = vmatpush1.xpose.msra.mxu0 0.0
        %526 = vmatprep.subr.mxu0 0.0
        %527 = vmatpush1.xpose.msra.mxu0 0.0
        %528 = vmatprep.subr.mxu0 0.0
        %529 = vmatpush1.xpose.msra.mxu0 0.0
        %530 = vmatprep.subr.mxu0 0.0
        %531 = vmatpush1.xpose.msra.mxu0 0.0
        %532 = vmatprep.subr.mxu0 0.0
        %533 = vmatpush1.xpose.msra.mxu0 0.0
        %534 = vmatprep.subr.mxu0 0.0
        %535 = vmatpush1.xpose.msra.mxu0 0.0
        %536 = vmatprep.subr.mxu0 0.0
        %537 = vmatpush1.xpose.msra.mxu0 0.0
        %538 = vmatprep.subr.mxu0 0.0
        %539 = vmatpush1.xpose.msra.mxu0 0.0
        %540 = vmatprep.subr.mxu0 0.0
        %541 = vmatpush1.xpose.msra.mxu0 0.0
        %542 = vmatprep.subr.mxu0 0.0
        %543 = vmatpush1.xpose.msra.mxu0 0.0
        %544 = vmatprep.subr.mxu0 0.0
        %545 = vmatpush1.xpose.msra.mxu0 0.0
        %546 = vmatprep.subr.mxu0 0.0
        %547 = vmatpush1.xpose.msra.mxu0 0.0
        %548 = vmatprep.subr.mxu0 0.0
        %549 = vmatpush1.xpose.msra.mxu0 0.0
        %550 = vmatprep.subr.mxu0 0.0
        %551 = vmatpush1.xpose.msra.mxu0 0.0
        %552 = vmatprep.subr.mxu0 0.0
        %553 = vmatpush1.xpose.msra.mxu0 0.0
        %554 = vmatprep.subr.mxu0 0.0
        %555 = vmatpush1.xpose.msra.mxu0 0.0
        %556 = vmatprep.subr.mxu0 0.0
        %557 = vmatpush1.xpose.msra.mxu0 0.0
        %558 = vmatprep.subr.mxu0 0.0
        %559 = vmatpush1.xpose.msra.mxu0 0.0
        %560 = vmatprep.subr.mxu0 0.0
        %561 = vmatpush1.xpose.msra.mxu0 0.0
        %562 = vmatprep.subr.mxu0 0.0
        %563 = vmatpush1.xpose.msra.mxu0 0.0
        %564 = vmatprep.subr.mxu0 0.0
        %565 = vmatpush1.xpose.msra.mxu0 0.0
        %566 = vmatprep.subr.mxu0 0.0
        %567 = vmatpush1.xpose.msra.mxu0 0.0
        %568 = vmatprep.subr.mxu0 0.0
        %569 = vmatpush1.xpose.msra.mxu0 0.0
        %570 = vmatprep.subr.mxu0 0.0
        %571 = vmatpush1.xpose.msra.mxu0 0.0
        %572 = vmatprep.subr.mxu0 0.0
        %573 = vmatpush1.xpose.msra.mxu0 0.0
        %574 = vmatprep.mubr.f32.mxu0 0.0
        %575 = vmatmul.mubr.f32.gmra.mrb[0].mxu0 %v505
        %v576 = vpop.f32.mrb[0].mxu0
        %v577 = vadd.f32 0.0, %v576
        %v578 = vpop.f32.mrb[0].mxu0
        %579 = vdwg.mxu0
        %v580 = vmul.f32 %v577, 0.17677669
        %vm581 = vcmask 64512
        %v582 = vsel %vm581, %v580, -inf
        %583 = vmax.xlane.f32.xlu0 %v582
        %v584 = vpop.xlane.xlu0 %583
        %v585 = vsub.f32 %v580, %v584
        %v586 = vmul.f32 %v585, 1.442695
        %v587 = vpow.pop %v586
        %v588 = vsel %vm581, %v587, 0.0
        %589 = vadd.xlane.f32.xlu0 %v588
        %v590 = vpop.xlane.xlu0 %589
        %v591 = vrcp.pop %v590
        %v592 = vmul.f32 %v587, %v591
        %593 = vrot.lane.b32.xlu0 %v501, 96
        %v594 = vpop.permute.xlu0 %593
        %v597 = vsel %vm581, %v592, 0
        %599 = vmatprep.subr.mxu0 0.0
        %600 = vmatpush1.msra.mxu0 %v594
        %601 = vmatprep.subr.mxu0 0.0
        %602 = vmatpush1.msra.mxu0 0.0
        %603 = vmatprep.subr.mxu0 0.0
        %604 = vmatpush1.msra.mxu0 0.0
        %605 = vmatprep.subr.mxu0 0.0
        %606 = vmatpush1.msra.mxu0 0.0
        %607 = vmatprep.subr.mxu0 0.0
        %608 = vmatpush1.msra.mxu0 0.0
        %609 = vmatprep.subr.mxu0 0.0
        %610 = vmatpush1.msra.mxu0 0.0
        %611 = vmatprep.subr.mxu0 0.0
        %612 = vmatpush1.msra.mxu0 0.0
        %613 = vmatprep.subr.mxu0 0.0
        %614 = vmatpush1.msra.mxu0 0.0
        %615 = vmatprep.subr.mxu0 0.0
        %616 = vmatpush1.msra.mxu0 0.0
        %617 = vmatprep.subr.mxu0 0.0
        %618 = vmatpush1.msra.mxu0 0.0
        %619 = vmatprep.subr.mxu0 0.0
        %620 = vmatpush1.msra.mxu0 0.0
        %621 = vmatprep.subr.mxu0 0.0
        %622 = vmatpush1.msra.mxu0 0.0
        %623 = vmatprep.subr.mxu0 0.0
        %624 = vmatpush1.msra.mxu0 0.0
        %625 = vmatprep.subr.mxu0 0.0
        %626 = vmatpush1.msra.mxu0 0.0
        %627 = vmatprep.subr.mxu0 0.0
        %628 = vmatpush1.msra.mxu0 0.0
        %629 = vmatprep.subr.mxu0 0.0
        %630 = vmatpush1.msra.mxu0 0.0
        %631 = vmatprep.subr.mxu0 0.0
        %632 = vmatpush1.msra.mxu0 0.0
        %633 = vmatprep.subr.mxu0 0.0
        %634 = vmatpush1.msra.mxu0 0.0
        %635 = vmatprep.subr.mxu0 0.0
        %636 = vmatpush1.msra.mxu0 0.0
        %637 = vmatprep.subr.mxu0 0.0
        %638 = vmatpush1.msra.mxu0 0.0
        %639 = vmatprep.subr.mxu0 0.0
        %640 = vmatpush1.msra.mxu0 0.0
        %641 = vmatprep.subr.mxu0 0.0
        %642 = vmatpush1.msra.mxu0 0.0
        %643 = vmatprep.subr.mxu0 0.0
        %644 = vmatpush1.msra.mxu0 0.0
        %645 = vmatprep.subr.mxu0 0.0
        %646 = vmatpush1.msra.mxu0 0.0
        %647 = vmatprep.subr.mxu0 0.0
        %648 = vmatpush1.msra.mxu0 0.0
        %649 = vmatprep.subr.mxu0 0.0
        %650 = vmatpush1.msra.mxu0 0.0
        %651 = vmatprep.subr.mxu0 0.0
        %652 = vmatpush1.msra.mxu0 0.0
        %653 = vmatprep.subr.mxu0 0.0
        %654 = vmatpush1.msra.mxu0 0.0
        %655 = vmatprep.subr.mxu0 0.0
        %656 = vmatpush1.msra.mxu0 0.0
        %657 = vmatprep.subr.mxu0 0.0
        %658 = vmatpush1.msra.mxu0 0.0
        %659 = vmatprep.subr.mxu0 0.0
        %660 = vmatpush1.msra.mxu0 0.0
        %661 = vmatprep.subr.mxu0 0.0
        %662 = vmatpush1.msra.mxu0 0.0
        %663 = vmatprep.mubr.f32.mxu0 0.0
        %664 = vmatmul.mubr.f32.gmra.mrb[0].mxu0 %v597
        %v665 = vpop.f32.mrb[0].mxu0
        %v666 = vadd.f32 0.0, %v665
        %v667 = vpop.f32.mrb[0].mxu0
        %668 = vdwg.mxu0
        %669 = vst.msk [vmem:[%s332] sm:$0xff] %vm346, %v666
        %s670 = sand.u32 %s171, 1
        %s671 = scalar_lea.sflag [#allocation4], %s670
        %s672 = sand.u32 %s171, 1
        %s673 = smul.addr %s672, 8
        %s674 = scalar_lea.vmem [#allocation10], %s673
        // Predicated region
        $region61: #{_rpa_call.1} parent=43 // pred_check
          %p675 = pneg %p181
        $region62: #{_rpa_call.1} parent=43 // pred_check_branch
          %677 = sbr.rel (%p675) target = $region64
        $region63: #{_rpa_call.1} parent=43 // pred_region
          %s679 = ssub.s32 128, 128
          %680 = vsyncadd %s671, %s679
          %s681 = smul.addr %s27, 128
          %s682 = scalar_lea.hbm %s6, %s681
          %s684 = sshll.u32 %s674, 4
          %s685 = int_to_ptr.vmem [resolvable:$true] %s684
          %687 = dma.vmem_to_hbm [thread:$0]  %s685, 128, %s682, %s671
        $region64: #{_rpa_call.1} parent=43 // pred_fallthru
          _
      $region44: #{_rpa_call.1} parent=5 // pred_fallthru
        _
      %p688 = scmp.le.s32.totalorder 2, %s22
      // Predicated region
      $region65: #{_rpa_call.1} parent=5 // pred_check
        %p689 = pneg %p688
      $region66: #{_rpa_call.1} parent=5 // pred_check_branch
        %691 = sbr.rel (%p689) target = $region68
      $region67: #{_rpa_call.1} parent=5 // pred_region
        %s692 = ssub.s32 %s22, 2
        // Predicated region
        $region69: #{_rpa_call.1} parent=67 // pred_check
          %p693 = pneg %p187
        $region70: #{_rpa_call.1} parent=67 // pred_check_branch
          %695 = sbr.rel (%p693) target = $region72
        $region71: #{_rpa_call.1} parent=67 // pred_region
          %s696 = sand.u32 %s172, 1
          %s697 = scalar_lea.sflag [#allocation4], %s696
          %s698 = sand.u32 %s172, 1
          %s699 = smul.addr %s698, 8
          %s700 = scalar_lea.vmem [#allocation10], %s699
          %701 = dma.done %s697, 128
        $region72: #{_rpa_call.1} parent=67 // pred_fallthru
          _
      $region68: #{_rpa_call.1} parent=5 // pred_fallthru
        _
    $region6: #{_rpa_call.1} parent=1 // loop_footer
      %s26 = sadd.s32 1, %s22
    $region7: #{_rpa_call.1} parent=1 // loop_footer_branch
      %21 = sbr.rel target = $region3
    $region8: #{_rpa_call.1} parent=1 // loop_exit
      _
    %702 = vsyncpa [#allocation3], 1
    %s703 = scalar_lea.sflag [#allocation3], 1
    %704 = vsyncpa %s703, 1
    %705 = vsyncpa [#allocation6], 1
    %s706 = scalar_lea.sflag [#allocation6], 1
    %707 = vsyncpa %s706, 1
    %708 = vsyncpa [#allocation9], 1
    %709 = vsyncpa [#allocation4], 1
    %s710 = scalar_lea.sflag [#allocation4], 1
    %711 = vsyncpa %s710, 1

// kernel: _rpa_call.1
$region0: #{_rpa_call.1}
  #allocation0 [shape = 'u32[]', space=smem, size = 0x4, offset = 0x4, fixed_abs, tag = 'smem constant byte address 0x4 - core index']
  #allocation1 [shape = 'u32[144,128]{1,0:T(1,128)}', space=vmem, size = 0x12000, scoped, tag = 'internal scratch']
  %s0 = inlined_call_operand.hbm [shape: f32[2,8,32], index: 0, kind: input, shape index: {}]
  %s1 = inlined_call_operand.hbm [shape: f32[2,8,32], index: 1, kind: input, shape index: {}]
  %s2 = inlined_call_operand.hbm [shape: f32[32,32], index: 2, kind: input, shape index: {}]
  %s3 = inlined_call_operand.vmem [shape: f32[1,32], index: 3, kind: input, shape index: {}]
  %s4 = inlined_call_operand.hbm [shape: f32[32,64], index: 4, kind: input, shape index: {}]
  %s5 = inlined_call_operand.vmem [shape: f32[1,64], index: 5, kind: input, shape index: {}]
  %s6 = inlined_call_operand.hbm [shape: f32[2,8,32], index: 6, kind: output, shape index: {}]
  %s7 = sld [smem:[#allocation0]]
  $region73: #{_rpa_call.1} parent=0
    _
  %s9 = ssub.s32 1, %s7
  %s10 = scalar_select 0, %s9, %s7
  $region1: #{_rpa_call.1} parent=0
    #allocation2 [shape = 'u8[8192]{0}', space=vmem, size = 0x2000, scoped, tag = 'input window, operand 0']
    #allocation3 [shape = 's32[2]{0}', space=sflag, size = 0x8, scoped, tag = 'scoped memory for _rpa_call.1']
    #allocation4 [shape = 's32[2]{0}', space=sflag, size = 0x8, scoped, tag = 'scoped memory for _rpa_call.1']
    #allocation5 [shape = 'u8[8192]{0}', space=vmem, size = 0x2000, scoped, tag = 'input window, operand 1']
    #allocation6 [shape = 's32[2]{0}', space=sflag, size = 0x8, scoped, tag = 'scoped memory for _rpa_call.1']
    #allocation7 [shape = 'u8[16384]{0}', space=vmem, size = 0x4000, scoped, tag = 'input window, operand 2, single buffered']
    #allocation8 [shape = 'u8[16384]{0}', space=vmem, size = 0x4000, scoped, tag = 'input window, operand 4, single buffered']
    #allocation9 [shape = 's32[1]{0}', space=sflag, size = 0x4, scoped, tag = 'scoped memory for _rpa_call.1']
    #allocation10 [shape = 'u8[8192]{0}', space=vmem, size = 0x2000, scoped, tag = 'output window, operand 0']
    %11 = vsyncpa [#allocation3], 0
    %s12 = scalar_lea.sflag [#allocation3], 1
    %13 = vsyncpa %s12, 0
    %14 = vsyncpa [#allocation6], 0
    %s15 = scalar_lea.sflag [#allocation6], 1
    %16 = vsyncpa %s15, 0
    %17 = vsyncpa [#allocation9], 0
    %18 = vsyncpa [#allocation4], 0
    %s19 = scalar_lea.sflag [#allocation4], 1
    %20 = vsyncpa %s19, 0
    loop: start=0, step=1, limit=4
    $region2: #{_rpa_call.1} parent=1 // loop_pre_header
      _
    $region3: #{_rpa_call.1} parent=1 // loop_header
      %s22 = sphi 0, %s26
      %p23 = scmp.ge.s32.totalorder %s22, 4
      %s32 = sphi 0, %s34
      %s35 = sphi 0, %s32
      %s36 = sphi 0, %s35
      %s52 = sphi 0, %s36
      %s58 = sphi 0, %s60
      %s61 = sphi 0, %s58
      %s62 = sphi 0, %s61
      %s78 = sphi 0, %s62
      %s82 = sphi 0, %s82
      %s84 = sphi 0, %s82
      %s85 = sphi 0, %s84
      %s99 = sphi 0, %s85
      %s103 = sphi 0, %s103
      %s105 = sphi 0, %s103
      %s106 = sphi 0, %s105
      %s120 = sphi 0, %s106
      %s124 = sphi 0, %s124
      %s126 = sphi 0, %s124
      %s127 = sphi 0, %s126
      %s141 = sphi 0, %s127
      %s145 = sphi 0, %s145
      %s147 = sphi 0, %s145
      %s148 = sphi 0, %s147
      %s162 = sphi 0, %s148
      %s168 = sphi 0, %s170
      %s171 = sphi 0, %s168
      %s172 = sphi 0, %s171
      %s188 = sphi 0, %s172
    $region4: #{_rpa_call.1} parent=1 // loop_header_branch
      %25 = sbr.rel (%p23) target = $region8
    $region5: #{_rpa_call.1} parent=1 // loop_body
      %s27 = ssub.s32 %s22, 1
      %s28 = ssub.s32 %s22, 2
      %s29 = sadd.s32 %s22, 1
      %s30 = ssub.s32 %s22, %s29
      %p31 = scmp.eq.s32.totalorder %s30, 0
      %s33 = sadd.s32 %s32, 1
      %s34 = scalar_select %p31, %s32, %s33
      %p37 = pneg %p31
      %p38 = scmp.eq.s32.totalorder %s22, 1
      %p39 = por %p37, %p38
      %p40 = scmp.ne.s32.totalorder %s32, %s35
      %p41 = scmp.eq.s32.totalorder %s22, 0
      %p42 = por %p40, %p41
      %p43 = scmp.ne.s32.totalorder %s32, %s35
      %p44 = scmp.eq.s32.totalorder %s27, 1
      %p45 = por %p43, %p44
      %p46 = scmp.ne.s32.totalorder %s35, %s36
      %p47 = scmp.eq.s32.totalorder %s27, 0
      %p48 = por %p46, %p47
      %p49 = scmp.ne.s32.totalorder %s35, %s36
      %p50 = scmp.eq.s32.totalorder %s28, 1
      %p51 = por %p49, %p50
      %p53 = scmp.ne.s32.totalorder %s36, %s52
      %p54 = scmp.eq.s32.totalorder %s28, 0
      %p55 = por %p53, %p54
      %s56 = ssub.s32 %s22, %s29
      %p57 = scmp.eq.s32.totalorder %s56, 0
      %s59 = sadd.s32 %s58, 1
      %s60 = scalar_select %p57, %s58, %s59
      %p63 = pneg %p57
      %p64 = scmp.eq.s32.totalorder %s22, 1
      %p65 = por %p63, %p64
      %p66 = scmp.ne.s32.totalorder %s58, %s61
      %p67 = scmp.eq.s32.totalorder %s22, 0
      %p68 = por %p66, %p67
      %p69 = scmp.ne.s32.totalorder %s58, %s61
      %p70 = scmp.eq.s32.totalorder %s27, 1
      %p71 = por %p69, %p70
      %p72 = scmp.ne.s32.totalorder %s61, %s62
      %p73 = scmp.eq.s32.totalorder %s27, 0
      %p74 = por %p72, %p73
      %p75 = scmp.ne.s32.totalorder %s61, %s62
      %p76 = scmp.eq.s32.totalorder %s28, 1
      %p77 = por %p75, %p76
      %p79 = scmp.ne.s32.totalorder %s62, %s78
      %p80 = scmp.eq.s32.totalorder %s28, 0
      %p81 = por %p79, %p80
      %s83 = sadd.s32 %s82, 1
      %p86 = scmp.eq.s32.totalorder %s22, 1
      %p87 = scmp.ne.s32.totalorder %s82, %s84
      %p88 = scmp.eq.s32.totalorder %s22, 0
      %p89 = por %p87, %p88
      %p90 = scmp.ne.s32.totalorder %s82, %s84
      %p91 = scmp.eq.s32.totalorder %s27, 1
      %p92 = por %p90, %p91
      %p93 = scmp.ne.s32.totalorder %s84, %s85
      %p94 = scmp.eq.s32.totalorder %s27, 0
      %p95 = por %p93, %p94
      %p96 = scmp.ne.s32.totalorder %s84, %s85
      %p97 = scmp.eq.s32.totalorder %s28, 1
      %p98 = por %p96, %p97
      %p100 = scmp.ne.s32.totalorder %s85, %s99
      %p101 = scmp.eq.s32.totalorder %s28, 0
      %p102 = por %p100, %p101
      %s104 = sadd.s32 %s103, 1
      %p107 = scmp.eq.s32.totalorder %s22, 1
      %p108 = scmp.ne.s32.totalorder %s103, %s105
      %p109 = scmp.eq.s32.totalorder %s22, 0
      %p110 = por %p108, %p109
      %p111 = scmp.ne.s32.totalorder %s103, %s105
      %p112 = scmp.eq.s32.totalorder %s27, 1
      %p113 = por %p111, %p112
      %p114 = scmp.ne.s32.totalorder %s105, %s106
      %p115 = scmp.eq.s32.totalorder %s27, 0
      %p116 = por %p114, %p115
      %p117 = scmp.ne.s32.totalorder %s105, %s106
      %p118 = scmp.eq.s32.totalorder %s28, 1
      %p119 = por %p117, %p118
      %p121 = scmp.ne.s32.totalorder %s106, %s120
      %p122 = scmp.eq.s32.totalorder %s28, 0
      %p123 = por %p121, %p122
      %s125 = sadd.s32 %s124, 1
      %p128 = scmp.eq.s32.totalorder %s22, 1
      %p129 = scmp.ne.s32.totalorder %s124, %s126
      %p130 = scmp.eq.s32.totalorder %s22, 0
      %p131 = por %p129, %p130
      %p132 = scmp.ne.s32.totalorder %s124, %s126
      %p133 = scmp.eq.s32.totalorder %s27, 1
      %p134 = por %p132, %p133
      %p135 = scmp.ne.s32.totalorder %s126, %s127
      %p136 = scmp.eq.s32.totalorder %s27, 0
      %p137 = por %p135, %p136
      %p138 = scmp.ne.s32.totalorder %s126, %s127
      %p139 = scmp.eq.s32.totalorder %s28, 1
      %p140 = por %p138, %p139
      %p142 = scmp.ne.s32.totalorder %s127, %s141
      %p143 = scmp.eq.s32.totalorder %s28, 0
      %p144 = por %p142, %p143
      %s146 = sadd.s32 %s145, 1
      %p149 = scmp.eq.s32.totalorder %s22, 1
      %p150 = scmp.ne.s32.totalorder %s145, %s147
      %p151 = scmp.eq.s32.totalorder %s22, 0
      %p152 = por %p150, %p151
      %p153 = scmp.ne.s32.totalorder %s145, %s147
      %p154 = scmp.eq.s32.totalorder %s27, 1
      %p155 = por %p153, %p154
      %p156 = scmp.ne.s32.totalorder %s147, %s148
      %p157 = scmp.eq.s32.totalorder %s27, 0
      %p158 = por %p156, %p157
      %p159 = scmp.ne.s32.totalorder %s147, %s148
      %p160 = scmp.eq.s32.totalorder %s28, 1
      %p161 = por %p159, %p160
      %p163 = scmp.ne.s32.totalorder %s148, %s162
      %p164 = scmp.eq.s32.totalorder %s28, 0
      %p165 = por %p163, %p164
      %s166 = ssub.s32 %s22, %s29
      %p167 = scmp.eq.s32.totalorder %s166, 0
      %s169 = sadd.s32 %s168, 1
      %s170 = scalar_select %p167, %s168, %s169
      %p173 = pneg %p167
      %p174 = scmp.eq.s32.totalorder %s22, 1
      %p175 = por %p173, %p174
      %p176 = scmp.ne.s32.totalorder %s168, %s171
      %p177 = scmp.eq.s32.totalorder %s22, 0
      %p178 = por %p176, %p177
      %p179 = scmp.ne.s32.totalorder %s168, %s171
      %p180 = scmp.eq.s32.totalorder %s27, 1
      %p181 = por %p179, %p180
      %p182 = scmp.ne.s32.totalorder %s171, %s172
      %p183 = scmp.eq.s32.totalorder %s27, 0
      %p184 = por %p182, %p183
      %p185 = scmp.ne.s32.totalorder %s171, %s172
      %p186 = scmp.eq.s32.totalorder %s28, 1
      %p187 = por %p185, %p186
      %p189 = scmp.ne.s32.totalorder %s172, %s188
      %p190 = scmp.eq.s32.totalorder %s28, 0
      %p191 = por %p189, %p190
      %p192 = scmp.le.s32.totalorder 1, %s22
      %p193 = scmp.lt.s32.totalorder %s22, 3
      %p194 = pnand %p192, %p193
      %p195 = pneg %p194
      // Predicated region
      $region9: #{_rpa_call.1} parent=5 // pred_check
        _
      $region10: #{_rpa_call.1} parent=5 // pred_check_branch
        %197 = sbr.rel (%p194) target = $region12
      $region11: #{_rpa_call.1} parent=5 // pred_region
        %s198 = ssub.s32 %s22, 1
        // Predicated region
        $region13: #{_rpa_call.1} parent=11 // pred_check
          %p199 = pneg %p95
        $region14: #{_rpa_call.1} parent=11 // pred_check_branch
          %201 = sbr.rel (%p199) target = $region16
        $region15: #{_rpa_call.1} parent=11 // pred_region
          %s203 = ssub.s32 512, 512
          %204 = vsyncadd [#allocation6], %s203
          %s205 = sshll.u32 [#allocation7], 4
          %s206 = int_to_ptr.vmem [resolvable:$true] %s205
          %211 = dma.hbm_to_vmem [thread:$0]  %s2, 512, %s206, [#allocation6], 128, 128, 8
        $region16: #{_rpa_call.1} parent=11 // pred_fallthru
          _
        // Predicated region
        $region17: #{_rpa_call.1} parent=11 // pred_check
          %p212 = pneg %p116
        $region18: #{_rpa_call.1} parent=11 // pred_check_branch
          %214 = sbr.rel (%p212) target = $region20
        $region19: #{_rpa_call.1} parent=11 // pred_region
          _
        $region20: #{_rpa_call.1} parent=11 // pred_fallthru
          _
        // Predicated region
        $region21: #{_rpa_call.1} parent=11 // pred_check
          %p215 = pneg %p137
        $region22: #{_rpa_call.1} parent=11 // pred_check_branch
          %217 = sbr.rel (%p215) target = $region24
        $region23: #{_rpa_call.1} parent=11 // pred_region
          %s219 = ssub.s32 512, 512
          %220 = vsyncadd [#allocation9], %s219
          %s221 = sshll.u32 [#allocation8], 4
          %s222 = int_to_ptr.vmem [resolvable:$true] %s221
          %227 = dma.hbm_to_vmem [thread:$0]  %s4, 512, %s222, [#allocation9], 128, 128, 8
        $region24: #{_rpa_call.1} parent=11 // pred_fallthru
          _
        // Predicated region
        $region25: #{_rpa_call.1} parent=11 // pred_check
          %p228 = pneg %p158
        $region26: #{_rpa_call.1} parent=11 // pred_check_branch
          %230 = sbr.rel (%p228) target = $region28
        $region27: #{_rpa_call.1} parent=11 // pred_region
          _
        $region28: #{_rpa_call.1} parent=11 // pred_fallthru
          _
      $region12: #{_rpa_call.1} parent=5 // pred_fallthru
        _
      %p231 = scmp.lt.s32.totalorder %s22, 2
      // Predicated region
      $region29: #{_rpa_call.1} parent=5 // pred_check
        %p232 = pneg %p231
      $region30: #{_rpa_call.1} parent=5 // pred_check_branch
        %234 = sbr.rel (%p232) target = $region32
      $region31: #{_rpa_call.1} parent=5 // pred_region
        // Predicated region
        $region33: #{_rpa_call.1} parent=31 // pred_check
          %p235 = pneg %p42
        $region34: #{_rpa_call.1} parent=31 // pred_check_branch
          %237 = sbr.rel (%p235) target = $region36
        $region35: #{_rpa_call.1} parent=31 // pred_region
          %s238 = sand.u32 %s32, 1
          %s239 = scalar_lea.sflag [#allocation3], %s238
          %s240 = sand.u32 %s32, 1
          %s241 = smul.addr %s240, 8
          %s242 = scalar_lea.vmem [#allocation2], %s241
          %s244 = ssub.s32 128, 128
          %245 = vsyncadd %s239, %s244
          %s246 = smul.addr %s22, 128
          %s247 = scalar_lea.hbm %s0, %s246
          %s249 = sshll.u32 %s242, 4
          %s250 = int_to_ptr.vmem [resolvable:$true] %s249
          %252 = dma.hbm_to_vmem [thread:$0]  %s247, 128, %s250, %s239
        $region36: #{_rpa_call.1} parent=31 // pred_fallthru
          _
        // Predicated region
        $region37: #{_rpa_call.1} parent=31 // pred_check
          %p253 = pneg %p68
        $region38: #{_rpa_call.1} parent=31 // pred_check_branch
          %255 = sbr.rel (%p253) target = $region40
        $region39: #{_rpa_call.1} parent=31 // pred_region
          %s256 = sand.u32 %s22, 1
          %s257 = scalar_lea.sflag [#allocation6], %s256
          %s258 = sand.u32 %s58, 1
          %s259 = smul.addr %s258, 8
          %s260 = scalar_lea.vmem [#allocation5], %s259
          %s262 = ssub.s32 128, 128
          %263 = vsyncadd %s257, %s262
          %s264 = smul.addr %s22, 128
          %s265 = scalar_lea.hbm %s1, %s264
          %s267 = sshll.u32 %s260, 4
          %s268 = int_to_ptr.vmem [resolvable:$true] %s267
          %270 = dma.hbm_to_vmem [thread:$0]  %s265, 128, %s268, %s257
        $region40: #{_rpa_call.1} parent=31 // pred_fallthru
          _
      $region32: #{_rpa_call.1} parent=5 // pred_fallthru
        _
      %p271 = scmp.le.s32.totalorder 1, %s22
      %p272 = scmp.lt.s32.totalorder %s22, 3
      %p273 = pnand %p271, %p272
      %p274 = pneg %p273
      // Predicated region
      $region41: #{_rpa_call.1} parent=5 // pred_check
        _
      $region42: #{_rpa_call.1} parent=5 // pred_check_branch
        %276 = sbr.rel (%p273) target = $region44
      $region43: #{_rpa_call.1} parent=5 // pred_region
        %s277 = ssub.s32 %s22, 1
        %s278 = sand.u32 %s35, 1
        %s279 = scalar_lea.sflag [#allocation3], %s278
        %s280 = sand.u32 %s35, 1
        %s281 = smul.addr %s280, 8
        %s282 = scalar_lea.vmem [#allocation2], %s281
        // Predicated region
        $region45: #{_rpa_call.1} parent=43 // pred_check
          %p283 = pneg %p48
        $region46: #{_rpa_call.1} parent=43 // pred_check_branch
          %285 = sbr.rel (%p283) target = $region48
        $region47: #{_rpa_call.1} parent=43 // pred_region
          %286 = dma.done %s279, 128
        $region48: #{_rpa_call.1} parent=43 // pred_fallthru
          _
        %s287 = sand.u32 %s27, 1
        %s288 = scalar_lea.sflag [#allocation6], %s287
        %s289 = sand.u32 %s61, 1
        %s290 = smul.addr %s289, 8
        %s291 = scalar_lea.vmem [#allocation5], %s290
        // Predicated region
        $region49: #{_rpa_call.1} parent=43 // pred_check
          %p292 = pneg %p74
        $region50: #{_rpa_call.1} parent=43 // pred_check_branch
          %294 = sbr.rel (%p292) target = $region52
        $region51: #{_rpa_call.1} parent=43 // pred_region
          %295 = dma.done %s288, 128
        $region52: #{_rpa_call.1} parent=43 // pred_fallthru
          _
        // Predicated region
        $region53: #{_rpa_call.1} parent=43 // pred_check
          %p296 = pneg %p95
        $region54: #{_rpa_call.1} parent=43 // pred_check_branch
          %298 = sbr.rel (%p296) target = $region56
        $region55: #{_rpa_call.1} parent=43 // pred_region
          %299 = dma.done [#allocation6], 512
        $region56: #{_rpa_call.1} parent=43 // pred_fallthru
          _
        // Predicated region
        $region57: #{_rpa_call.1} parent=43 // pred_check
          %p300 = pneg %p137
        $region58: #{_rpa_call.1} parent=43 // pred_check_branch
          %302 = sbr.rel (%p300) target = $region60
        $region59: #{_rpa_call.1} parent=43 // pred_region
          %303 = dma.done [#allocation9], 512
        $region60: #{_rpa_call.1} parent=43 // pred_fallthru
          _
        %s304 = sand.u32 %s35, 1
        %s305 = scalar_lea.sflag [#allocation3], %s304
        %s306 = sand.u32 %s35, 1
        %s307 = smul.addr %s306, 8
        %s308 = scalar_lea.vmem [#allocation2], %s307
        %p309 = pneg %p48
        %p310 = pneg %p45
        %s311 = sand.u32 %s27, 1
        %s312 = scalar_lea.sflag [#allocation6], %s311
        %s313 = sand.u32 %s61, 1
        %s314 = smul.addr %s313, 8
        %s315 = scalar_lea.vmem [#allocation5], %s314
        %p316 = pneg %p74
        %p317 = pneg %p71
        %p318 = pneg %p95
        %p319 = pneg %p92
        %p320 = pneg %p116
        %p321 = pneg %p113
        %p322 = pneg %p137
        %p323 = pneg %p134
        %p324 = pneg %p158
        %p325 = pneg %p155
        %p326 = pneg %p184
        %p327 = pneg %p181
        %s328 = sand.u32 %s171, 1
        %s329 = scalar_lea.sflag [#allocation4], %s328
        %s330 = sand.u32 %s171, 1
        %s331 = smul.addr %s330, 8
        %s332 = scalar_lea.vmem [#allocation10], %s331
        %v333 = vld [vmem:[%s282] sm:$0xff]
        %v334 = vld [vmem:[%s291] sm:$0xff]
        %v335 = vld [vmem:[#allocation7] sm:$0xff]
        %v336 = vld [vmem:[#allocation7 + $0x8] sm:$0xff]
        %v337 = vld [vmem:[#allocation7 + $0x10] sm:$0xff]
        %v338 = vld [vmem:[#allocation7 + $0x18] sm:$0xff]
        %v339 = vld [vmem:[%s3] sm:$0x1]
        %v341 = vlaneseq
        %v342 = vshrl.u32 %v341, 7
        %v343 = vsub.s32 0, %v342
        %v344 = vrot.slane %v339, %v343
        %vm346 = vcmask 261120
        %v348 = vsel %vm346, %v333, 0
        %350 = vmatprep.subr.mxu0 0.0
        %351 = vmatpush1.msra.mxu0 %v335
        %352 = vmatprep.subr.mxu0 0.0
        %353 = vmatpush1.msra.mxu0 %v336
        %354 = vmatprep.subr.mxu0 0.0
        %355 = vmatpush1.msra.mxu0 %v337
        %356 = vmatprep.subr.mxu0 0.0
        %357 = vmatpush1.msra.mxu0 %v338
        %358 = vmatprep.subr.mxu0 0.0
        %359 = vmatpush1.msra.mxu0 0.0
        %360 = vmatprep.subr.mxu0 0.0
        %361 = vmatpush1.msra.mxu0 0.0
        %362 = vmatprep.subr.mxu0 0.0
        %363 = vmatpush1.msra.mxu0 0.0
        %364 = vmatprep.subr.mxu0 0.0
        %365 = vmatpush1.msra.mxu0 0.0
        %366 = vmatprep.subr.mxu0 0.0
        %367 = vmatpush1.msra.mxu0 0.0
        %368 = vmatprep.subr.mxu0 0.0
        %369 = vmatpush1.msra.mxu0 0.0
        %370 = vmatprep.subr.mxu0 0.0
        %371 = vmatpush1.msra.mxu0 0.0
        %372 = vmatprep.subr.mxu0 0.0
        %373 = vmatpush1.msra.mxu0 0.0
        %374 = vmatprep.subr.mxu0 0.0
        %375 = vmatpush1.msra.mxu0 0.0
        %376 = vmatprep.subr.mxu0 0.0
        %377 = vmatpush1.msra.mxu0 0.0
        %378 = vmatprep.subr.mxu0 0.0
        %379 = vmatpush1.msra.mxu0 0.0
        %380 = vmatprep.subr.mxu0 0.0
        %381 = vmatpush1.msra.mxu0 0.0
        %382 = vmatprep.subr.mxu0 0.0
        %383 = vmatpush1.msra.mxu0 0.0
        %384 = vmatprep.subr.mxu0 0.0
        %385 = vmatpush1.msra.mxu0 0.0
        %386 = vmatprep.subr.mxu0 0.0
        %387 = vmatpush1.msra.mxu0 0.0
        %388 = vmatprep.subr.mxu0 0.0
        %389 = vmatpush1.msra.mxu0 0.0
        %390 = vmatprep.subr.mxu0 0.0
        %391 = vmatpush1.msra.mxu0 0.0
        %392 = vmatprep.subr.mxu0 0.0
        %393 = vmatpush1.msra.mxu0 0.0
        %394 = vmatprep.subr.mxu0 0.0
        %395 = vmatpush1.msra.mxu0 0.0
        %396 = vmatprep.subr.mxu0 0.0
        %397 = vmatpush1.msra.mxu0 0.0
        %398 = vmatprep.subr.mxu0 0.0
        %399 = vmatpush1.msra.mxu0 0.0
        %400 = vmatprep.subr.mxu0 0.0
        %401 = vmatpush1.msra.mxu0 0.0
        %402 = vmatprep.subr.mxu0 0.0
        %403 = vmatpush1.msra.mxu0 0.0
        %404 = vmatprep.subr.mxu0 0.0
        %405 = vmatpush1.msra.mxu0 0.0
        %406 = vmatprep.subr.mxu0 0.0
        %407 = vmatpush1.msra.mxu0 0.0
        %408 = vmatprep.subr.mxu0 0.0
        %409 = vmatpush1.msra.mxu0 0.0
        %410 = vmatprep.subr.mxu0 0.0
        %411 = vmatpush1.msra.mxu0 0.0
        %412 = vmatprep.subr.mxu0 0.0
        %413 = vmatpush1.msra.mxu0 0.0
        %414 = vmatprep.mubr.f32.mxu0 0.0
        %415 = vmatmul.mubr.f32.gmra.mrb[0].mxu0 %v348
        %v416 = vpop.f32.mrb[0].mxu0
        %v417 = vadd.f32 %v344, %v416
        %v418 = vpop.f32.mrb[0].mxu0
        %419 = vdwg.mxu0
        %v420 = vld [vmem:[#allocation8] sm:$0xff]
        %v421 = vld [vmem:[#allocation8 + $0x8] sm:$0xff]
        %v422 = vld [vmem:[#allocation8 + $0x10] sm:$0xff]
        %v423 = vld [vmem:[#allocation8 + $0x18] sm:$0xff]
        %v424 = vld [vmem:[%s5] sm:$0x1]
        %v426 = vlaneseq
        %v427 = vshrl.u32 %v426, 7
        %v428 = vsub.s32 0, %v427
        %v429 = vrot.slane %v424, %v428
        %v432 = vsel %vm346, %v334, 0
        %434 = vmatprep.subr.mxu0 0.0
        %435 = vmatpush1.msra.mxu0 %v420
        %436 = vmatprep.subr.mxu0 0.0
        %437 = vmatpush1.msra.mxu0 %v421
        %438 = vmatprep.subr.mxu0 0.0
        %439 = vmatpush1.msra.mxu0 %v422
        %440 = vmatprep.subr.mxu0 0.0
        %441 = vmatpush1.msra.mxu0 %v423
        %442 = vmatprep.subr.mxu0 0.0
        %443 = vmatpush1.msra.mxu0 0.0
        %444 = vmatprep.subr.mxu0 0.0
        %445 = vmatpush1.msra.mxu0 0.0
        %446 = vmatprep.subr.mxu0 0.0
        %447 = vmatpush1.msra.mxu0 0.0
        %448 = vmatprep.subr.mxu0 0.0
        %449 = vmatpush1.msra.mxu0 0.0
        %450 = vmatprep.subr.mxu0 0.0
        %451 = vmatpush1.msra.mxu0 0.0
        %452 = vmatprep.subr.mxu0 0.0
        %453 = vmatpush1.msra.mxu0 0.0
        %454 = vmatprep.subr.mxu0 0.0
        %455 = vmatpush1.msra.mxu0 0.0
        %456 = vmatprep.subr.mxu0 0.0
        %457 = vmatpush1.msra.mxu0 0.0
        %458 = vmatprep.subr.mxu0 0.0
        %459 = vmatpush1.msra.mxu0 0.0
        %460 = vmatprep.subr.mxu0 0.0
        %461 = vmatpush1.msra.mxu0 0.0
        %462 = vmatprep.subr.mxu0 0.0
        %463 = vmatpush1.msra.mxu0 0.0
        %464 = vmatprep.subr.mxu0 0.0
        %465 = vmatpush1.msra.mxu0 0.0
        %466 = vmatprep.subr.mxu0 0.0
        %467 = vmatpush1.msra.mxu0 0.0
        %468 = vmatprep.subr.mxu0 0.0
        %469 = vmatpush1.msra.mxu0 0.0
        %470 = vmatprep.subr.mxu0 0.0
        %471 = vmatpush1.msra.mxu0 0.0
        %472 = vmatprep.subr.mxu0 0.0
        %473 = vmatpush1.msra.mxu0 0.0
        %474 = vmatprep.subr.mxu0 0.0
        %475 = vmatpush1.msra.mxu0 0.0
        %476 = vmatprep.subr.mxu0 0.0
        %477 = vmatpush1.msra.mxu0 0.0
        %478 = vmatprep.subr.mxu0 0.0
        %479 = vmatpush1.msra.mxu0 0.0
        %480 = vmatprep.subr.mxu0 0.0
        %481 = vmatpush1.msra.mxu0 0.0
        %482 = vmatprep.subr.mxu0 0.0
        %483 = vmatpush1.msra.mxu0 0.0
        %484 = vmatprep.subr.mxu0 0.0
        %485 = vmatpush1.msra.mxu0 0.0
        %486 = vmatprep.subr.mxu0 0.0
        %487 = vmatpush1.msra.mxu0 0.0
        %488 = vmatprep.subr.mxu0 0.0
        %489 = vmatpush1.msra.mxu0 0.0
        %490 = vmatprep.subr.mxu0 0.0
        %491 = vmatpush1.msra.mxu0 0.0
        %492 = vmatprep.subr.mxu0 0.0
        %493 = vmatpush1.msra.mxu0 0.0
        %494 = vmatprep.subr.mxu0 0.0
        %495 = vmatpush1.msra.mxu0 0.0
        %496 = vmatprep.subr.mxu0 0.0
        %497 = vmatpush1.msra.mxu0 0.0
        %498 = vmatprep.mubr.f32.mxu0 0.0
        %499 = vmatmul.mubr.f32.gmra.mrb[0].mxu0 %v432
        %v500 = vpop.f32.mrb[0].mxu0
        %v501 = vadd.f32 %v429, %v500
        %v502 = vpop.f32.mrb[0].mxu0
        %503 = vdwg.mxu0
        %v505 = vsel %vm346, %v417, 0
        %v508 = vsel %vm346, %v501, 0
        %510 = vmatprep.subr.mxu0 0.0
        %511 = vmatpush1.xpose.msra.mxu0 %v508
        %512 = vmatprep.subr.mxu0 0.0
        %513 = vmatpush1.xpose.msra.mxu0 0.0
        %514 = vmatprep.subr.mxu0 0.0
        %515 = vmatpush1.xpose.msra.mxu0 0.0
        %516 = vmatprep.subr.mxu0 0.0
        %517 = vmatpush1.xpose.msra.mxu0 0.0
        %518 = vmatprep.subr.mxu0 0.0
        %519 = vmatpush1.xpose.msra.mxu0 0.0
        %520 = vmatprep.subr.mxu0 0.0
        %521 = vmatpush1.xpose.msra.mxu0 0.0
        %522 = vmatprep.subr.mxu0 0.0
        %523 = vmatpush1.xpose.msra.mxu0 0.0
        %524 = vmatprep.subr.mxu0 0.0
        %525 = vmatpush1.xpose.msra.mxu0 0.0
        %526 = vmatprep.subr.mxu0 0.0
        %527 = vmatpush1.xpose.msra.mxu0 0.0
        %528 = vmatprep.subr.mxu0 0.0
        %529 = vmatpush1.xpose.msra.mxu0 0.0
        %530 = vmatprep.subr.mxu0 0.0
        %531 = vmatpush1.xpose.msra.mxu0 0.0
        %532 = vmatprep.subr.mxu0 0.0
        %533 = vmatpush1.xpose.msra.mxu0 0.0
        %534 = vmatprep.subr.mxu0 0.0
        %535 = vmatpush1.xpose.msra.mxu0 0.0
        %536 = vmatprep.subr.mxu0 0.0
        %537 = vmatpush1.xpose.msra.mxu0 0.0
        %538 = vmatprep.subr.mxu0 0.0
        %539 = vmatpush1.xpose.msra.mxu0 0.0
        %540 = vmatprep.subr.mxu0 0.0
        %541 = vmatpush1.xpose.msra.mxu0 0.0
        %542 = vmatprep.subr.mxu0 0.0
        %543 = vmatpush1.xpose.msra.mxu0 0.0
        %544 = vmatprep.subr.mxu0 0.0
        %545 = vmatpush1.xpose.msra.mxu0 0.0
        %546 = vmatprep.subr.mxu0 0.0
        %547 = vmatpush1.xpose.msra.mxu0 0.0
        %548 = vmatprep.subr.mxu0 0.0
        %549 = vmatpush1.xpose.msra.mxu0 0.0
        %550 = vmatprep.subr.mxu0 0.0
        %551 = vmatpush1.xpose.msra.mxu0 0.0
        %552 = vmatprep.subr.mxu0 0.0
        %553 = vmatpush1.xpose.msra.mxu0 0.0
        %554 = vmatprep.subr.mxu0 0.0
        %555 = vmatpush1.xpose.msra.mxu0 0.0
        %556 = vmatprep.subr.mxu0 0.0
        %557 = vmatpush1.xpose.msra.mxu0 0.0
        %558 = vmatprep.subr.mxu0 0.0
        %559 = vmatpush1.xpose.msra.mxu0 0.0
        %560 = vmatprep.subr.mxu0 0.0
        %561 = vmatpush1.xpose.msra.mxu0 0.0
        %562 = vmatprep.subr.mxu0 0.0
        %563 = vmatpush1.xpose.msra.mxu0 0.0
        %564 = vmatprep.subr.mxu0 0.0
        %565 = vmatpush1.xpose.msra.mxu0 0.0
        %566 = vmatprep.subr.mxu0 0.0
        %567 = vmatpush1.xpose.msra.mxu0 0.0
        %568 = vmatprep.subr.mxu0 0.0
        %569 = vmatpush1.xpose.msra.mxu0 0.0
        %570 = vmatprep.subr.mxu0 0.0
        %571 = vmatpush1.xpose.msra.mxu0 0.0
        %572 = vmatprep.subr.mxu0 0.0
        %573 = vmatpush1.xpose.msra.mxu0 0.0
        %574 = vmatprep.mubr.f32.mxu0 0.0
        %575 = vmatmul.mubr.f32.gmra.mrb[0].mxu0 %v505
        %v576 = vpop.f32.mrb[0].mxu0
        %v577 = vadd.f32 0.0, %v576
        %v578 = vpop.f32.mrb[0].mxu0
        %579 = vdwg.mxu0
        %v580 = vmul.f32 %v577, 0.17677669
        %vm581 = vcmask 64512
        %v582 = vsel %vm581, %v580, -inf
        %583 = vmax.xlane.f32.xlu0 %v582
        %v584 = vpop.xlane.xlu0 %583
        %v585 = vsub.f32 %v580, %v584
        %v586 = vmul.f32 %v585, 1.442695
        %v587 = vpow.pop %v586
        %v588 = vsel %vm581, %v587, 0.0
        %589 = vadd.xlane.f32.xlu0 %v588
        %v590 = vpop.xlane.xlu0 %589
        %v591 = vrcp.pop %v590
        %v592 = vmul.f32 %v587, %v591
        %593 = vrot.lane.b32.xlu0 %v501, 96
        %v594 = vpop.permute.xlu0 %593
        %v597 = vsel %vm581, %v592, 0
        %599 = vmatprep.subr.mxu0 0.0
        %600 = vmatpush1.msra.mxu0 %v594
        %601 = vmatprep.subr.mxu0 0.0
        %602 = vmatpush1.msra.mxu0 0.0
        %603 = vmatprep.subr.mxu0 0.0
        %604 = vmatpush1.msra.mxu0 0.0
        %605 = vmatprep.subr.mxu0 0.0
        %606 = vmatpush1.msra.mxu0 0.0
        %607 = vmatprep.subr.mxu0 0.0
        %608 = vmatpush1.msra.mxu0 0.0
        %609 = vmatprep.subr.mxu0 0.0
        %610 = vmatpush1.msra.mxu0 0.0
        %611 = vmatprep.subr.mxu0 0.0
        %612 = vmatpush1.msra.mxu0 0.0
        %613 = vmatprep.subr.mxu0 0.0
        %614 = vmatpush1.msra.mxu0 0.0
        %615 = vmatprep.subr.mxu0 0.0
        %616 = vmatpush1.msra.mxu0 0.0
        %617 = vmatprep.subr.mxu0 0.0
        %618 = vmatpush1.msra.mxu0 0.0
        %619 = vmatprep.subr.mxu0 0.0
        %620 = vmatpush1.msra.mxu0 0.0
        %621 = vmatprep.subr.mxu0 0.0
        %622 = vmatpush1.msra.mxu0 0.0
        %623 = vmatprep.subr.mxu0 0.0
        %624 = vmatpush1.msra.mxu0 0.0
        %625 = vmatprep.subr.mxu0 0.0
        %626 = vmatpush1.msra.mxu0 0.0
        %627 = vmatprep.subr.mxu0 0.0
        %628 = vmatpush1.msra.mxu0 0.0
        %629 = vmatprep.subr.mxu0 0.0
        %630 = vmatpush1.msra.mxu0 0.0
        %631 = vmatprep.subr.mxu0 0.0
        %632 = vmatpush1.msra.mxu0 0.0
        %633 = vmatprep.subr.mxu0 0.0
        %634 = vmatpush1.msra.mxu0 0.0
        %635 = vmatprep.subr.mxu0 0.0
        %636 = vmatpush1.msra.mxu0 0.0
        %637 = vmatprep.subr.mxu0 0.0
        %638 = vmatpush1.msra.mxu0 0.0
        %639 = vmatprep.subr.mxu0 0.0
        %640 = vmatpush1.msra.mxu0 0.0
        %641 = vmatprep.subr.mxu0 0.0
        %642 = vmatpush1.msra.mxu0 0.0
        %643 = vmatprep.subr.mxu0 0.0
        %644 = vmatpush1.msra.mxu0 0.0
        %645 = vmatprep.subr.mxu0 0.0
        %646 = vmatpush1.msra.mxu0 0.0
        %647 = vmatprep.subr.mxu0 0.0
        %648 = vmatpush1.msra.mxu0 0.0
        %649 = vmatprep.subr.mxu0 0.0
        %650 = vmatpush1.msra.mxu0 0.0
        %651 = vmatprep.subr.mxu0 0.0
        %652 = vmatpush1.msra.mxu0 0.0
        %653 = vmatprep.subr.mxu0 0.0
        %654 = vmatpush1.msra.mxu0 0.0
        %655 = vmatprep.subr.mxu0 0.0
        %656 = vmatpush1.msra.mxu0 0.0
        %657 = vmatprep.subr.mxu0 0.0
        %658 = vmatpush1.msra.mxu0 0.0
        %659 = vmatprep.subr.mxu0 0.0
        %660 = vmatpush1.msra.mxu0 0.0
        %661 = vmatprep.subr.mxu0 0.0
        %662 = vmatpush1.msra.mxu0 0.0
        %663 = vmatprep.mubr.f32.mxu0 0.0
        %664 = vmatmul.mubr.f32.gmra.mrb[0].mxu0 %v597
        %v665 = vpop.f32.mrb[0].mxu0
        %v666 = vadd.f32 0.0, %v665
        %v667 = vpop.f32.mrb[0].mxu0
        %668 = vdwg.mxu0
        %669 = vst.msk [vmem:[%s332] sm:$0xff] %vm346, %v666
        %s670 = sand.u32 %s171, 1
        %s671 = scalar_lea.sflag [#allocation4], %s670
        %s672 = sand.u32 %s171, 1
        %s673 = smul.addr %s672, 8
        %s674 = scalar_lea.vmem [#allocation10], %s673
        // Predicated region
        $region61: #{_rpa_call.1} parent=43 // pred_check
          %p675 = pneg %p181
        $region62: #{_rpa_call.1} parent=43 // pred_check_branch
          %677 = sbr.rel (%p675) target = $region64
        $region63: #{_rpa_call.1} parent=43 // pred_region
          %s679 = ssub.s32 128, 128
          %680 = vsyncadd %s671, %s679
          %s681 = smul.addr %s27, 128
          %s682 = scalar_lea.hbm %s6, %s681
          %s684 = sshll.u32 %s674, 4
          %s685 = int_to_ptr.vmem [resolvable:$true] %s684
          %687 = dma.vmem_to_hbm [thread:$0]  %s685, 128, %s682, %s671
        $region64: #{_rpa_call.1} parent=43 // pred_fallthru
          _
      $region44: #{_rpa_call.1} parent=5 // pred_fallthru
        _
      %p688 = scmp.le.s32.totalorder 2, %s22
      // Predicated region
      $region65: #{_rpa_call.1} parent=5 // pred_check
        %p689 = pneg %p688
      $region66: #{_rpa_call.1} parent=5 // pred_check_branch
        %691 = sbr.rel (%p689) target = $region68
      $region67: #{_rpa_call.1} parent=5 // pred_region
        %s692 = ssub.s32 %s22, 2
        // Predicated region
        $region69: #{_rpa_call.1} parent=67 // pred_check
          %p693 = pneg %p187
        $region70: #{_rpa_call.1} parent=67 // pred_check_branch
          %695 = sbr.rel (%p693) target = $region72
        $region71: #{_rpa_call.1} parent=67 // pred_region
          %s696 = sand.u32 %s172, 1
          %s697 = scalar_lea.sflag [#allocation4], %s696
          %s698 = sand.u32 %s172, 1
          %s699 = smul.addr %s698, 8
          %s700 = scalar_lea.vmem [#allocation10], %s699
          %701 = dma.done %s697, 128
        $region72: #{_rpa_call.1} parent=67 // pred_fallthru
          _
      $region68: #{_rpa_call.1} parent=5 // pred_fallthru
        _
    $region6: #{_rpa_call.1} parent=1 // loop_footer
      %s26 = sadd.s32 1, %s22
    $region7: #{_rpa_call.1} parent=1 // loop_footer_branch
      %21 = sbr.rel target = $region3
    $region8: #{_rpa_call.1} parent=1 // loop_exit
      _
    %702 = vsyncpa [#allocation3], 1
    %s703 = scalar_lea.sflag [#allocation3], 1
    %704 = vsyncpa %s703, 1
    %705 = vsyncpa [#allocation6], 1
    %s706 = scalar_lea.sflag [#allocation6], 1
    %707 = vsyncpa %s706, 1
    %708 = vsyncpa [#allocation9], 1
    %709 = vsyncpa [#allocation4], 1
    %s710 = scalar_lea.sflag [#allocation4], 1
    %711 = vsyncpa %s710, 1

</llo_original>
